<compile_context>
chip_gen: v5e
topology: v5e:2x2
jax: 0.10.0
libtpu: 0.0.40
codegen_flags: <defaults>
</compile_context>

<pallas_src>
import functools

import jax
import jax.numpy as jnp
from jax.experimental import pallas as pl
from jax.experimental.pallas import tpu as pltpu

LN_EPS = 1e-5  # nn.LayerNorm default


def _round_up(x, m):
    return (x + m - 1) // m * m


def _vmem_capacity_bytes():
    try:
        return int(pltpu.get_tpu_info().vmem_capacity_bytes)
    except Exception:
        return 128 << 20  # conservative v5e/v6e default if query unavailable


def encoder_kernel(x_ref,
                   w_in_ref, b_in_ref,
                   w_h0_ref, b_h0_ref,
                   w_h1_ref, b_h1_ref,
                   w_out_ref, b_out_ref,
                   gamma_ref, beta_ref,
                   o_ref,
                   *, inv_fout, mm_dtype):
    # Per-tile cast to the matmul dtype (avoids a wrapper-side HBM pass over x).
    x = x_ref[...].astype(mm_dtype)

    # fc_in + ReLU (f32 accumulation on the MXU; bias/ReLU in f32)
    h = jnp.dot(x, w_in_ref[...], preferred_element_type=jnp.float32) + b_in_ref[...]
    h = jnp.maximum(h, 0.0)
    # fc_h0 + ReLU
    h = jnp.dot(h.astype(mm_dtype), w_h0_ref[...],
                preferred_element_type=jnp.float32) + b_h0_ref[...]
    h = jnp.maximum(h, 0.0)
    # fc_h1 + ReLU
    h = jnp.dot(h.astype(mm_dtype), w_h1_ref[...],
                preferred_element_type=jnp.float32) + b_h1_ref[...]
    h = jnp.maximum(h, 0.0)
    # fc_out
    y = jnp.dot(h.astype(mm_dtype), w_out_ref[...],
                preferred_element_type=jnp.float32) + b_out_ref[...]

    # LayerNorm over the REAL out_features lanes. Padded lanes of y are exactly
    # zero (zero-padded w_out/b_out), so sum(y) and sum(y*y) over the padded
    # width already equal the real-lane sums -> E[y^2]-mean^2, no per-tile mask.
    # Garbage rows of a partial last block may produce NaN here; their
    # writeback is clipped by Pallas, so they never reach the real output.
    mean = jnp.sum(y, axis=-1, keepdims=True) * inv_fout
    ex2 = jnp.sum(y * y, axis=-1, keepdims=True) * inv_fout
    var = jnp.maximum(ex2 - mean * mean, 0.0)
    y_norm = (y - mean) * jax.lax.rsqrt(var + LN_EPS)
    # gamma/beta padded lanes are zero -> padded output lanes stay zero.
    o_ref[...] = (y_norm * gamma_ref[...] + beta_ref[...]).astype(o_ref.dtype)


def prepare_params(params, *, use_bf16=True):
    """Pad/cast the weights ONCE (cache the result across forward calls).

    Hidden/out feature dims are zero-padded to multiples of 128 (lane-dense
    stores, full MXU lanes). in_features is NOT padded: x keeps the real Fin
    as a full-dim block, so the x DMA is never inflated.
    """
    w_in, b_in, w_h0, b_h0, w_h1, b_h1, w_out, b_out, gamma, beta = params
    Fin, H = w_in.shape
    Fout = w_out.shape[1]
    H_p = _round_up(H, 128)
    Fout_p = _round_up(Fout, 128)
    mm_dtype = jnp.bfloat16 if use_bf16 else jnp.float32

    def pad2(a, rows, cols, dtype):
        return jnp.pad(a, ((0, rows - a.shape[0]), (0, cols - a.shape[1]))).astype(dtype)

    residents = (
        pad2(w_in, Fin, H_p, mm_dtype),
        pad2(b_in, 1, H_p, jnp.float32),
        pad2(w_h0, H_p, H_p, mm_dtype),
        pad2(b_h0, 1, H_p, jnp.float32),
        pad2(w_h1, H_p, H_p, mm_dtype),
        pad2(b_h1, 1, H_p, jnp.float32),
        pad2(w_out, H_p, Fout_p, mm_dtype),
        pad2(b_out, 1, Fout_p, jnp.float32),
        pad2(gamma, 1, Fout_p, jnp.float32),
        pad2(beta, 1, Fout_p, jnp.float32),
    )
    return {
        "residents": residents,
        "dims": (Fin, H, Fout, H_p, Fout_p),
        "mm_dtype": mm_dtype,
    }


def encoder_forward(x_in, prepared, *, row_tile=1024, out_dtype=None):
    """x_in: (B, S, in_features). Returns (B, S, out_features)."""
    B, S, Fin = x_in.shape
    Fin_w, H, Fout, H_p, Fout_p = prepared["dims"]
    assert Fin == Fin_w, "x_in feature dim must match the prepared weights"
    residents = prepared["residents"]
    mm_dtype = prepared["mm_dtype"]
    out_dtype = x_in.dtype if out_dtype is None else out_dtype

    N = B * S
    x2d = x_in.reshape(N, Fin)  # no pad / no cast: no extra HBM pass over x

    x_bytes = jnp.dtype(x_in.dtype).itemsize
    o_bytes = jnp.dtype(out_dtype).itemsize
    weight_bytes = sum(int(a.size) * jnp.dtype(a.dtype).itemsize for a in residents)

    # ---- generation-aware VMEM budget (64 MiB/TC on v7x, 128 MiB v5e/v6e) ----
    vmem_cap = _vmem_capacity_bytes()
    ceiling = (vmem_cap * 7) // 8
    # per-row footprint: double-buffered x tile + double-buffered out tile
    # + live f32 intermediates (~3 hidden tiles + y).
    per_row = 2 * Fin * x_bytes + 2 * Fout_p * o_bytes + 3 * H_p * 4 + Fout_p * 4
    avail = ceiling - weight_bytes - (4 << 20)
    tm_vmem = max(8, (avail // per_row) // 8 * 8) if avail > 8 * per_row else 8

    # ---- row tile: as large as the VMEM budget allows, but always >= 2 grid
    #      steps when N allows (v7x megacore + x/out DMA pipelining). ----
    tm = min(int(row_tile), tm_vmem, _round_up(N, 8))
    if N > 8:
        tm = min(tm, _round_up(pl.cdiv(N, 2), 8))
    tm = max(8, (tm // 8) * 8)
    num_tiles = pl.cdiv(N, tm)

    flops = 2 * N * (Fin * H + 2 * H * H + H * Fout) + 8 * N * Fout
    bytes_accessed = N * Fin * x_bytes + N * Fout_p * o_bytes + weight_bytes
    cost = pl.CostEstimate(flops=flops, transcendentals=N,
                           bytes_accessed=bytes_accessed)

    kernel = functools.partial(encoder_kernel,
                               inv_fout=float(1.0 / Fout),
                               mm_dtype=mm_dtype)

    def run(single_buffer_weights):
        def resident_spec(a):
            shape = a.shape
            idx = lambda i, _n=len(shape): (0,) * _n
            if single_buffer_weights:
                # Constant index map -> DMA'd once; Buffered(1) also drops the
                # useless second VMEM buffer (halves resident-weight VMEM).
                return pl.BlockSpec(shape, idx, pipeline_mode=pl.Buffered(1))
            return pl.BlockSpec(shape, idx)

        wmult = 1 if single_buffer_weights else 2
        vmem_limit = int(1.25 * (wmult * weight_bytes + tm * per_row)) + (8 << 20)
        vmem_limit = max(32 << 20, min(vmem_limit, ceiling))

        return pl.pallas_call(
            kernel,
            out_shape=jax.ShapeDtypeStruct((N, Fout_p), out_dtype),
            grid_spec=pltpu.PrefetchScalarGridSpec(
                num_scalar_prefetch=0,
                grid=(num_tiles,),
                in_specs=[pl.BlockSpec((tm, Fin), lambda i: (i, 0))]
                         + [resident_spec(a) for a in residents],
                out_specs=pl.BlockSpec((tm, Fout_p), lambda i: (i, 0)),
            ),
            compiler_params=pltpu.CompilerParams(
                dimension_semantics=("parallel",),
                vmem_limit_bytes=int(vmem_limit),
            ),
            cost_estimate=cost,
        )(x2d, *residents)

    try:
        out2d = run(True)
    except Exception:
        # Pallas build without pipeline_mode / Buffered(1) support: fall back to
        # the default double-buffered resident operands (correct, more VMEM).
        out2d = run(False)

    return out2d[:, :Fout].reshape(B, S, Fout)


def make_params(key, in_features, hidden_features, out_features):
    """Deterministic synthetic parameters (weights stored as (in, out))."""
    ks = jax.random.split(key, 8)
    scale = 0.1

    def lin(kw, kb, fan_in, fan_out):
        w = scale * jax.random.normal(kw, (fan_in, fan_out), jnp.float32)
        b = scale * jax.random.normal(kb, (1, fan_out), jnp.float32)
        return w, b

    w_in, b_in = lin(ks[0], ks[1], in_features, hidden_features)
    w_h0, b_h0 = lin(ks[2], ks[3], hidden_features, hidden_features)
    w_h1, b_h1 = lin(ks[4], ks[5], hidden_features, hidden_features)
    w_out, b_out = lin(ks[6], ks[7], hidden_features, out_features)
    gamma = jnp.ones((1, out_features), jnp.float32)   # LayerNorm weight init
    beta = jnp.zeros((1, out_features), jnp.float32)   # LayerNorm bias init
    return (w_in, b_in, w_h0, b_h0, w_h1, b_h1, w_out, b_out, gamma, beta)


def encoder_reference(x_in, params, *, matmul_dtype=jnp.float32):
    """Pure-JAX reference mirroring the PyTorch forward (norm_type='ln')."""
    w_in, b_in, w_h0, b_h0, w_h1, b_h1, w_out, b_out, gamma, beta = params

    def lin(x, w, b):
        return jnp.dot(x.astype(matmul_dtype), w.astype(matmul_dtype),
                       preferred_element_type=jnp.float32) + b

    x = jnp.maximum(lin(x_in, w_in, b_in), 0.0)
    x = jnp.maximum(lin(x, w_h0, b_h0), 0.0)
    x = jnp.maximum(lin(x, w_h1, b_h1), 0.0)
    x = lin(x, w_out, b_out)
    x2 = x.reshape(-1, x.shape[-1])
    mean = jnp.mean(x2, axis=-1, keepdims=True)
    var = jnp.mean((x2 - mean) ** 2, axis=-1, keepdims=True)
    x2 = (x2 - mean) * jax.lax.rsqrt(var + LN_EPS) * gamma + beta
    return x2.reshape(x_in.shape[0], x_in.shape[1], -1)


if __name__ == "__main__":
    # Small shapes implied by forward: x_in is (B, S, in_features).
    B, S = 2, 8
    in_features, hidden_features, out_features = 16, 32, 16

    key = jax.random.PRNGKey(0)
    k_x, k_p = jax.random.split(key)
    x_in = jax.random.normal(k_x, (B, S, in_features), jnp.float32)
    params = make_params(k_p, in_features, hidden_features, out_features)

    # Default path: bf16 MXU operands, f32 accumulation / bias / ReLU / LN.
    prep_bf16 = prepare_params(params, use_bf16=True)
    out_bf16 = jax.block_until_ready(encoder_forward(x_in, prep_bf16))
    ref_bf16 = encoder_reference(x_in, params, matmul_dtype=jnp.bfloat16)
    assert out_bf16.shape == (B, S, out_features)
    assert jnp.allclose(out_bf16, ref_bf16, atol=5e-3, rtol=5e-3), \
        "bf16 mismatch vs JAX reference"

    # Full-f32 operand path: matches the pure-JAX reference tightly.
    prep_f32 = prepare_params(params, use_bf16=False)
    out_f32 = jax.block_until_ready(encoder_forward(x_in, prep_f32))
    ref_f32 = encoder_reference(x_in, params)
    assert out_f32.shape == (B, S, out_features)
    assert jnp.allclose(out_f32, ref_f32, atol=1e-4, rtol=1e-4), \
        "f32 mismatch vs JAX reference"

    print("KERNEL_OK")
</pallas_src>

<mosaic_0001>
module attributes {stable_mosaic.version = 11 : i64} {
  func.func @encoder_kernel(%arg0: i32, %arg1: memref<8x16xf32, #tpu.memory_space<vmem>>, %arg2: memref<16x128xbf16, #tpu.memory_space<vmem>>, %arg3: memref<1x128xf32, #tpu.memory_space<vmem>>, %arg4: memref<128x128xbf16, #tpu.memory_space<vmem>>, %arg5: memref<1x128xf32, #tpu.memory_space<vmem>>, %arg6: memref<128x128xbf16, #tpu.memory_space<vmem>>, %arg7: memref<1x128xf32, #tpu.memory_space<vmem>>, %arg8: memref<128x128xbf16, #tpu.memory_space<vmem>>, %arg9: memref<1x128xf32, #tpu.memory_space<vmem>>, %arg10: memref<1x128xf32, #tpu.memory_space<vmem>>, %arg11: memref<1x128xf32, #tpu.memory_space<vmem>>, %arg12: memref<8x128xf32, #tpu.memory_space<vmem>>) attributes {dimension_semantics = [#tpu.dimension_semantics<parallel>], iteration_bounds = array<i64: 2>, scalar_prefetch = 0 : i64, scratch_operands = 0 : i64, tpu.core_type = #tpu.core_type<tc>, window_params = [{transform_indices = @transform_0, window_bounds = array<i64: 8, 16>}, {pipeline_mode = #tpu.pipeline_mode<synchronous>, transform_indices = @transform_1, window_bounds = array<i64: 16, 128>}, {pipeline_mode = #tpu.pipeline_mode<synchronous>, transform_indices = @transform_2, window_bounds = array<i64: 1, 128>}, {pipeline_mode = #tpu.pipeline_mode<synchronous>, transform_indices = @transform_3, window_bounds = array<i64: 128, 128>}, {pipeline_mode = #tpu.pipeline_mode<synchronous>, transform_indices = @transform_4, window_bounds = array<i64: 1, 128>}, {pipeline_mode = #tpu.pipeline_mode<synchronous>, transform_indices = @transform_5, window_bounds = array<i64: 128, 128>}, {pipeline_mode = #tpu.pipeline_mode<synchronous>, transform_indices = @transform_6, window_bounds = array<i64: 1, 128>}, {pipeline_mode = #tpu.pipeline_mode<synchronous>, transform_indices = @transform_7, window_bounds = array<i64: 128, 128>}, {pipeline_mode = #tpu.pipeline_mode<synchronous>, transform_indices = @transform_8, window_bounds = array<i64: 1, 128>}, {pipeline_mode = #tpu.pipeline_mode<synchronous>, transform_indices = @transform_9, window_bounds = array<i64: 1, 128>}, {pipeline_mode = #tpu.pipeline_mode<synchronous>, transform_indices = @transform_10, window_bounds = array<i64: 1, 128>}, {transform_indices = @transform_11, window_bounds = array<i64: 8, 128>}]} {
    %c0 = arith.constant 0 : index
    %c0_0 = arith.constant 0 : index
    %0 = vector.load %arg1[%c0, %c0_0] : memref<8x16xf32, #tpu.memory_space<vmem>>, vector<8x16xf32>
    %1 = arith.truncf %0 : vector<8x16xf32> to vector<8x16xbf16>
    %c0_1 = arith.constant 0 : index
    %c0_2 = arith.constant 0 : index
    %2 = vector.load %arg2[%c0_1, %c0_2] : memref<16x128xbf16, #tpu.memory_space<vmem>>, vector<16x128xbf16>
    %cst = arith.constant dense<0.000000e+00> : vector<8x128xf32>
    %3 = tpu.matmul %1, %2, %cst {dimension_numbers = #tpu.dot_dimension_numbers<[1], [0], [0], [1], [0, 0, 1, 1], [], []>} : vector<8x16xbf16>, vector<16x128xbf16>, vector<8x128xf32> -> vector<8x128xf32>
    %c0_3 = arith.constant 0 : index
    %c0_4 = arith.constant 0 : index
    %4 = vector.load %arg3[%c0_3, %c0_4] : memref<1x128xf32, #tpu.memory_space<vmem>>, vector<1x128xf32>
    %5 = vector.broadcast %4 : vector<1x128xf32> to vector<8x128xf32>
    %6 = arith.addf %3, %5 : vector<8x128xf32>
    %cst_5 = arith.constant 0.000000e+00 : f32
    %7 = vector.broadcast %cst_5 : f32 to vector<8x128xf32>
    %8 = arith.maximumf %6, %7 : vector<8x128xf32>
    %9 = arith.truncf %8 : vector<8x128xf32> to vector<8x128xbf16>
    %c0_6 = arith.constant 0 : index
    %c0_7 = arith.constant 0 : index
    %10 = vector.load %arg4[%c0_6, %c0_7] : memref<128x128xbf16, #tpu.memory_space<vmem>>, vector<128x128xbf16>
    %cst_8 = arith.constant dense<0.000000e+00> : vector<8x128xf32>
    %11 = tpu.matmul %9, %10, %cst_8 {dimension_numbers = #tpu.dot_dimension_numbers<[1], [0], [0], [1], [0, 0, 1, 1], [], []>} : vector<8x128xbf16>, vector<128x128xbf16>, vector<8x128xf32> -> vector<8x128xf32>
    %c0_9 = arith.constant 0 : index
    %c0_10 = arith.constant 0 : index
    %12 = vector.load %arg5[%c0_9, %c0_10] : memref<1x128xf32, #tpu.memory_space<vmem>>, vector<1x128xf32>
    %13 = vector.broadcast %12 : vector<1x128xf32> to vector<8x128xf32>
    %14 = arith.addf %11, %13 : vector<8x128xf32>
    %cst_11 = arith.constant 0.000000e+00 : f32
    %15 = vector.broadcast %cst_11 : f32 to vector<8x128xf32>
    %16 = arith.maximumf %14, %15 : vector<8x128xf32>
    %17 = arith.truncf %16 : vector<8x128xf32> to vector<8x128xbf16>
    %c0_12 = arith.constant 0 : index
    %c0_13 = arith.constant 0 : index
    %18 = vector.load %arg6[%c0_12, %c0_13] : memref<128x128xbf16, #tpu.memory_space<vmem>>, vector<128x128xbf16>
    %cst_14 = arith.constant dense<0.000000e+00> : vector<8x128xf32>
    %19 = tpu.matmul %17, %18, %cst_14 {dimension_numbers = #tpu.dot_dimension_numbers<[1], [0], [0], [1], [0, 0, 1, 1], [], []>} : vector<8x128xbf16>, vector<128x128xbf16>, vector<8x128xf32> -> vector<8x128xf32>
    %c0_15 = arith.constant 0 : index
    %c0_16 = arith.constant 0 : index
    %20 = vector.load %arg7[%c0_15, %c0_16] : memref<1x128xf32, #tpu.memory_space<vmem>>, vector<1x128xf32>
    %21 = vector.broadcast %20 : vector<1x128xf32> to vector<8x128xf32>
    %22 = arith.addf %19, %21 : vector<8x128xf32>
    %cst_17 = arith.constant 0.000000e+00 : f32
    %23 = vector.broadcast %cst_17 : f32 to vector<8x128xf32>
    %24 = arith.maximumf %22, %23 : vector<8x128xf32>
    %25 = arith.truncf %24 : vector<8x128xf32> to vector<8x128xbf16>
    %c0_18 = arith.constant 0 : index
    %c0_19 = arith.constant 0 : index
    %26 = vector.load %arg8[%c0_18, %c0_19] : memref<128x128xbf16, #tpu.memory_space<vmem>>, vector<128x128xbf16>
    %cst_20 = arith.constant dense<0.000000e+00> : vector<8x128xf32>
    %27 = tpu.matmul %25, %26, %cst_20 {dimension_numbers = #tpu.dot_dimension_numbers<[1], [0], [0], [1], [0, 0, 1, 1], [], []>} : vector<8x128xbf16>, vector<128x128xbf16>, vector<8x128xf32> -> vector<8x128xf32>
    %c0_21 = arith.constant 0 : index
    %c0_22 = arith.constant 0 : index
    %28 = vector.load %arg9[%c0_21, %c0_22] : memref<1x128xf32, #tpu.memory_space<vmem>>, vector<1x128xf32>
    %29 = vector.broadcast %28 : vector<1x128xf32> to vector<8x128xf32>
    %30 = arith.addf %27, %29 : vector<8x128xf32>
    %cst_23 = arith.constant dense<0.000000e+00> : vector<8xf32>
    %31 = vector.multi_reduction <add>, %30, %cst_23 [1] : vector<8x128xf32> to vector<8xf32>
    %32 = vector.shape_cast %31 : vector<8xf32> to vector<8x1xf32>
    %cst_24 = arith.constant 6.250000e-02 : f32
    %33 = vector.broadcast %cst_24 : f32 to vector<8x1xf32>
    %34 = arith.mulf %32, %33 : vector<8x1xf32>
    %35 = arith.mulf %30, %30 : vector<8x128xf32>
    %cst_25 = arith.constant dense<0.000000e+00> : vector<8xf32>
    %36 = vector.multi_reduction <add>, %35, %cst_25 [1] : vector<8x128xf32> to vector<8xf32>
    %37 = vector.shape_cast %36 : vector<8xf32> to vector<8x1xf32>
    %cst_26 = arith.constant 6.250000e-02 : f32
    %38 = vector.broadcast %cst_26 : f32 to vector<8x1xf32>
    %39 = arith.mulf %37, %38 : vector<8x1xf32>
    %40 = arith.mulf %34, %34 : vector<8x1xf32>
    %41 = arith.subf %39, %40 : vector<8x1xf32>
    %cst_27 = arith.constant 0.000000e+00 : f32
    %42 = vector.broadcast %cst_27 : f32 to vector<8x1xf32>
    %43 = arith.maximumf %41, %42 : vector<8x1xf32>
    %44 = vector.broadcast %34 : vector<8x1xf32> to vector<8x128xf32>
    %45 = arith.subf %30, %44 : vector<8x128xf32>
    %cst_28 = arith.constant 9.99999974E-6 : f32
    %46 = vector.broadcast %cst_28 : f32 to vector<8x1xf32>
    %47 = arith.addf %43, %46 : vector<8x1xf32>
    %48 = math.rsqrt %47 : vector<8x1xf32>
    %49 = vector.broadcast %48 : vector<8x1xf32> to vector<8x128xf32>
    %50 = arith.mulf %45, %49 : vector<8x128xf32>
    %c0_29 = arith.constant 0 : index
    %c0_30 = arith.constant 0 : index
    %51 = vector.load %arg10[%c0_29, %c0_30] : memref<1x128xf32, #tpu.memory_space<vmem>>, vector<1x128xf32>
    %52 = vector.broadcast %51 : vector<1x128xf32> to vector<8x128xf32>
    %53 = arith.mulf %50, %52 : vector<8x128xf32>
    %c0_31 = arith.constant 0 : index
    %c0_32 = arith.constant 0 : index
    %54 = vector.load %arg11[%c0_31, %c0_32] : memref<1x128xf32, #tpu.memory_space<vmem>>, vector<1x128xf32>
    %55 = vector.broadcast %54 : vector<1x128xf32> to vector<8x128xf32>
    %56 = arith.addf %53, %55 : vector<8x128xf32>
    %c0_33 = arith.constant 0 : index
    %c0_34 = arith.constant 0 : index
    %57 = vector.load %arg12[%c0_33, %c0_34] : memref<8x128xf32, #tpu.memory_space<vmem>>, vector<8x128xf32>
    tpu.vector_store %arg12[%c0_33, %c0_34], %56 {strides = array<i32>} : memref<8x128xf32, #tpu.memory_space<vmem>>, vector<8x128xf32>,
    return
  }
  func.func @transform_0(%arg0: i32) -> (i32, i32) {
    %c0_i32 = arith.constant 0 : i32
    %c0_i32_0 = arith.constant 0 : i32
    return %arg0, %c0_i32 : i32, i32
  }
  func.func @transform_1(%arg0: i32) -> (i32, i32) {
    %c0_i32 = arith.constant 0 : i32
    %c0_i32_0 = arith.constant 0 : i32
    %c0_i32_1 = arith.constant 0 : i32
    return %c0_i32, %c0_i32_0 : i32, i32
  }
  func.func @transform_2(%arg0: i32) -> (i32, i32) {
    %c0_i32 = arith.constant 0 : i32
    %c0_i32_0 = arith.constant 0 : i32
    %c0_i32_1 = arith.constant 0 : i32
    return %c0_i32, %c0_i32_0 : i32, i32
  }
  func.func @transform_3(%arg0: i32) -> (i32, i32) {
    %c0_i32 = arith.constant 0 : i32
    %c0_i32_0 = arith.constant 0 : i32
    %c0_i32_1 = arith.constant 0 : i32
    return %c0_i32, %c0_i32_0 : i32, i32
  }
  func.func @transform_4(%arg0: i32) -> (i32, i32) {
    %c0_i32 = arith.constant 0 : i32
    %c0_i32_0 = arith.constant 0 : i32
    %c0_i32_1 = arith.constant 0 : i32
    return %c0_i32, %c0_i32_0 : i32, i32
  }
  func.func @transform_5(%arg0: i32) -> (i32, i32) {
    %c0_i32 = arith.constant 0 : i32
    %c0_i32_0 = arith.constant 0 : i32
    %c0_i32_1 = arith.constant 0 : i32
    return %c0_i32, %c0_i32_0 : i32, i32
  }
  func.func @transform_6(%arg0: i32) -> (i32, i32) {
    %c0_i32 = arith.constant 0 : i32
    %c0_i32_0 = arith.constant 0 : i32
    %c0_i32_1 = arith.constant 0 : i32
    return %c0_i32, %c0_i32_0 : i32, i32
  }
  func.func @transform_7(%arg0: i32) -> (i32, i32) {
    %c0_i32 = arith.constant 0 : i32
    %c0_i32_0 = arith.constant 0 : i32
    %c0_i32_1 = arith.constant 0 : i32
    return %c0_i32, %c0_i32_0 : i32, i32
  }
  func.func @transform_8(%arg0: i32) -> (i32, i32) {
    %c0_i32 = arith.constant 0 : i32
    %c0_i32_0 = arith.constant 0 : i32
    %c0_i32_1 = arith.constant 0 : i32
    return %c0_i32, %c0_i32_0 : i32, i32
  }
  func.func @transform_9(%arg0: i32) -> (i32, i32) {
    %c0_i32 = arith.constant 0 : i32
    %c0_i32_0 = arith.constant 0 : i32
    %c0_i32_1 = arith.constant 0 : i32
    return %c0_i32, %c0_i32_0 : i32, i32
  }
  func.func @transform_10(%arg0: i32) -> (i32, i32) {
    %c0_i32 = arith.constant 0 : i32
    %c0_i32_0 = arith.constant 0 : i32
    %c0_i32_1 = arith.constant 0 : i32
    return %c0_i32, %c0_i32_0 : i32, i32
  }
  func.func @transform_11(%arg0: i32) -> (i32, i32) {
    %c0_i32 = arith.constant 0 : i32
    %c0_i32_0 = arith.constant 0 : i32
    return %arg0, %c0_i32 : i32, i32
  }
}

module attributes {stable_mosaic.version = 11 : i64} {
  func.func @encoder_kernel(%arg0: i32, %arg1: memref<8x16xf32, #tpu.memory_space<vmem>>, %arg2: memref<16x128xbf16, #tpu.memory_space<vmem>>, %arg3: memref<1x128xf32, #tpu.memory_space<vmem>>, %arg4: memref<128x128xbf16, #tpu.memory_space<vmem>>, %arg5: memref<1x128xf32, #tpu.memory_space<vmem>>, %arg6: memref<128x128xbf16, #tpu.memory_space<vmem>>, %arg7: memref<1x128xf32, #tpu.memory_space<vmem>>, %arg8: memref<128x128xbf16, #tpu.memory_space<vmem>>, %arg9: memref<1x128xf32, #tpu.memory_space<vmem>>, %arg10: memref<1x128xf32, #tpu.memory_space<vmem>>, %arg11: memref<1x128xf32, #tpu.memory_space<vmem>>, %arg12: memref<8x128xf32, #tpu.memory_space<vmem>>) attributes {dimension_semantics = [#tpu.dimension_semantics<parallel>], iteration_bounds = array<i64: 2>, scalar_prefetch = 0 : i64, scratch_operands = 0 : i64, tpu.core_type = #tpu.core_type<tc>, window_params = [{transform_indices = @transform_0, window_bounds = array<i64: 8, 16>}, {pipeline_mode = #tpu.pipeline_mode<synchronous>, transform_indices = @transform_1, window_bounds = array<i64: 16, 128>}, {pipeline_mode = #tpu.pipeline_mode<synchronous>, transform_indices = @transform_2, window_bounds = array<i64: 1, 128>}, {pipeline_mode = #tpu.pipeline_mode<synchronous>, transform_indices = @transform_3, window_bounds = array<i64: 128, 128>}, {pipeline_mode = #tpu.pipeline_mode<synchronous>, transform_indices = @transform_4, window_bounds = array<i64: 1, 128>}, {pipeline_mode = #tpu.pipeline_mode<synchronous>, transform_indices = @transform_5, window_bounds = array<i64: 128, 128>}, {pipeline_mode = #tpu.pipeline_mode<synchronous>, transform_indices = @transform_6, window_bounds = array<i64: 1, 128>}, {pipeline_mode = #tpu.pipeline_mode<synchronous>, transform_indices = @transform_7, window_bounds = array<i64: 128, 128>}, {pipeline_mode = #tpu.pipeline_mode<synchronous>, transform_indices = @transform_8, window_bounds = array<i64: 1, 128>}, {pipeline_mode = #tpu.pipeline_mode<synchronous>, transform_indices = @transform_9, window_bounds = array<i64: 1, 128>}, {pipeline_mode = #tpu.pipeline_mode<synchronous>, transform_indices = @transform_10, window_bounds = array<i64: 1, 128>}, {transform_indices = @transform_11, window_bounds = array<i64: 8, 128>}]} {
    %c0 = arith.constant 0 : index
    %c0_0 = arith.constant 0 : index
    %0 = vector.load %arg1[%c0, %c0_0] : memref<8x16xf32, #tpu.memory_space<vmem>>, vector<8x16xf32>
    %1 = arith.truncf %0 : vector<8x16xf32> to vector<8x16xbf16>
    %c0_1 = arith.constant 0 : index
    %c0_2 = arith.constant 0 : index
    %2 = vector.load %arg2[%c0_1, %c0_2] : memref<16x128xbf16, #tpu.memory_space<vmem>>, vector<16x128xbf16>
    %cst = arith.constant dense<0.000000e+00> : vector<8x128xf32>
    %3 = tpu.matmul %1, %2, %cst {dimension_numbers = #tpu.dot_dimension_numbers<[1], [0], [0], [1], [0, 0, 1, 1], [], []>} : vector<8x16xbf16>, vector<16x128xbf16>, vector<8x128xf32> -> vector<8x128xf32>
    %c0_3 = arith.constant 0 : index
    %c0_4 = arith.constant 0 : index
    %4 = vector.load %arg3[%c0_3, %c0_4] : memref<1x128xf32, #tpu.memory_space<vmem>>, vector<1x128xf32>
    %5 = vector.broadcast %4 : vector<1x128xf32> to vector<8x128xf32>
    %6 = arith.addf %3, %5 : vector<8x128xf32>
    %cst_5 = arith.constant 0.000000e+00 : f32
    %7 = vector.broadcast %cst_5 : f32 to vector<8x128xf32>
    %8 = arith.maximumf %6, %7 : vector<8x128xf32>
    %9 = arith.truncf %8 : vector<8x128xf32> to vector<8x128xbf16>
    %c0_6 = arith.constant 0 : index
    %c0_7 = arith.constant 0 : index
    %10 = vector.load %arg4[%c0_6, %c0_7] : memref<128x128xbf16, #tpu.memory_space<vmem>>, vector<128x128xbf16>
    %cst_8 = arith.constant dense<0.000000e+00> : vector<8x128xf32>
    %11 = tpu.matmul %9, %10, %cst_8 {dimension_numbers = #tpu.dot_dimension_numbers<[1], [0], [0], [1], [0, 0, 1, 1], [], []>} : vector<8x128xbf16>, vector<128x128xbf16>, vector<8x128xf32> -> vector<8x128xf32>
    %c0_9 = arith.constant 0 : index
    %c0_10 = arith.constant 0 : index
    %12 = vector.load %arg5[%c0_9, %c0_10] : memref<1x128xf32, #tpu.memory_space<vmem>>, vector<1x128xf32>
    %13 = vector.broadcast %12 : vector<1x128xf32> to vector<8x128xf32>
    %14 = arith.addf %11, %13 : vector<8x128xf32>
    %cst_11 = arith.constant 0.000000e+00 : f32
    %15 = vector.broadcast %cst_11 : f32 to vector<8x128xf32>
    %16 = arith.maximumf %14, %15 : vector<8x128xf32>
    %17 = arith.truncf %16 : vector<8x128xf32> to vector<8x128xbf16>
    %c0_12 = arith.constant 0 : index
    %c0_13 = arith.constant 0 : index
    %18 = vector.load %arg6[%c0_12, %c0_13] : memref<128x128xbf16, #tpu.memory_space<vmem>>, vector<128x128xbf16>
    %cst_14 = arith.constant dense<0.000000e+00> : vector<8x128xf32>
    %19 = tpu.matmul %17, %18, %cst_14 {dimension_numbers = #tpu.dot_dimension_numbers<[1], [0], [0], [1], [0, 0, 1, 1], [], []>} : vector<8x128xbf16>, vector<128x128xbf16>, vector<8x128xf32> -> vector<8x128xf32>
    %c0_15 = arith.constant 0 : index
    %c0_16 = arith.constant 0 : index
    %20 = vector.load %arg7[%c0_15, %c0_16] : memref<1x128xf32, #tpu.memory_space<vmem>>, vector<1x128xf32>
    %21 = vector.broadcast %20 : vector<1x128xf32> to vector<8x128xf32>
    %22 = arith.addf %19, %21 : vector<8x128xf32>
    %cst_17 = arith.constant 0.000000e+00 : f32
    %23 = vector.broadcast %cst_17 : f32 to vector<8x128xf32>
    %24 = arith.maximumf %22, %23 : vector<8x128xf32>
    %25 = arith.truncf %24 : vector<8x128xf32> to vector<8x128xbf16>
    %c0_18 = arith.constant 0 : index
    %c0_19 = arith.constant 0 : index
    %26 = vector.load %arg8[%c0_18, %c0_19] : memref<128x128xbf16, #tpu.memory_space<vmem>>, vector<128x128xbf16>
    %cst_20 = arith.constant dense<0.000000e+00> : vector<8x128xf32>
    %27 = tpu.matmul %25, %26, %cst_20 {dimension_numbers = #tpu.dot_dimension_numbers<[1], [0], [0], [1], [0, 0, 1, 1], [], []>} : vector<8x128xbf16>, vector<128x128xbf16>, vector<8x128xf32> -> vector<8x128xf32>
    %c0_21 = arith.constant 0 : index
    %c0_22 = arith.constant 0 : index
    %28 = vector.load %arg9[%c0_21, %c0_22] : memref<1x128xf32, #tpu.memory_space<vmem>>, vector<1x128xf32>
    %29 = vector.broadcast %28 : vector<1x128xf32> to vector<8x128xf32>
    %30 = arith.addf %27, %29 : vector<8x128xf32>
    %cst_23 = arith.constant dense<0.000000e+00> : vector<8xf32>
    %31 = vector.multi_reduction <add>, %30, %cst_23 [1] : vector<8x128xf32> to vector<8xf32>
    %32 = vector.shape_cast %31 : vector<8xf32> to vector<8x1xf32>
    %cst_24 = arith.constant 6.250000e-02 : f32
    %33 = vector.broadcast %cst_24 : f32 to vector<8x1xf32>
    %34 = arith.mulf %32, %33 : vector<8x1xf32>
    %35 = arith.mulf %30, %30 : vector<8x128xf32>
    %cst_25 = arith.constant dense<0.000000e+00> : vector<8xf32>
    %36 = vector.multi_reduction <add>, %35, %cst_25 [1] : vector<8x128xf32> to vector<8xf32>
    %37 = vector.shape_cast %36 : vector<8xf32> to vector<8x1xf32>
    %cst_26 = arith.constant 6.250000e-02 : f32
    %38 = vector.broadcast %cst_26 : f32 to vector<8x1xf32>
    %39 = arith.mulf %37, %38 : vector<8x1xf32>
    %40 = arith.mulf %34, %34 : vector<8x1xf32>
    %41 = arith.subf %39, %40 : vector<8x1xf32>
    %cst_27 = arith.constant 0.000000e+00 : f32
    %42 = vector.broadcast %cst_27 : f32 to vector<8x1xf32>
    %43 = arith.maximumf %41, %42 : vector<8x1xf32>
    %44 = vector.broadcast %34 : vector<8x1xf32> to vector<8x128xf32>
    %45 = arith.subf %30, %44 : vector<8x128xf32>
    %cst_28 = arith.constant 9.99999974E-6 : f32
    %46 = vector.broadcast %cst_28 : f32 to vector<8x1xf32>
    %47 = arith.addf %43, %46 : vector<8x1xf32>
    %48 = math.rsqrt %47 : vector<8x1xf32>
    %49 = vector.broadcast %48 : vector<8x1xf32> to vector<8x128xf32>
    %50 = arith.mulf %45, %49 : vector<8x128xf32>
    %c0_29 = arith.constant 0 : index
    %c0_30 = arith.constant 0 : index
    %51 = vector.load %arg10[%c0_29, %c0_30] : memref<1x128xf32, #tpu.memory_space<vmem>>, vector<1x128xf32>
    %52 = vector.broadcast %51 : vector<1x128xf32> to vector<8x128xf32>
    %53 = arith.mulf %50, %52 : vector<8x128xf32>
    %c0_31 = arith.constant 0 : index
    %c0_32 = arith.constant 0 : index
    %54 = vector.load %arg11[%c0_31, %c0_32] : memref<1x128xf32, #tpu.memory_space<vmem>>, vector<1x128xf32>
    %55 = vector.broadcast %54 : vector<1x128xf32> to vector<8x128xf32>
    %56 = arith.addf %53, %55 : vector<8x128xf32>
    %c0_33 = arith.constant 0 : index
    %c0_34 = arith.constant 0 : index
    %57 = vector.load %arg12[%c0_33, %c0_34] : memref<8x128xf32, #tpu.memory_space<vmem>>, vector<8x128xf32>
    tpu.vector_store %arg12[%c0_33, %c0_34], %56 {strides = array<i32>} : memref<8x128xf32, #tpu.memory_space<vmem>>, vector<8x128xf32>,
    return
  }
  func.func @transform_0(%arg0: i32) -> (i32, i32) {
    %c0_i32 = arith.constant 0 : i32
    %c0_i32_0 = arith.constant 0 : i32
    return %arg0, %c0_i32 : i32, i32
  }
  func.func @transform_1(%arg0: i32) -> (i32, i32) {
    %c0_i32 = arith.constant 0 : i32
    %c0_i32_0 = arith.constant 0 : i32
    %c0_i32_1 = arith.constant 0 : i32
    return %c0_i32, %c0_i32_0 : i32, i32
  }
  func.func @transform_2(%arg0: i32) -> (i32, i32) {
    %c0_i32 = arith.constant 0 : i32
    %c0_i32_0 = arith.constant 0 : i32
    %c0_i32_1 = arith.constant 0 : i32
    return %c0_i32, %c0_i32_0 : i32, i32
  }
  func.func @transform_3(%arg0: i32) -> (i32, i32) {
    %c0_i32 = arith.constant 0 : i32
    %c0_i32_0 = arith.constant 0 : i32
    %c0_i32_1 = arith.constant 0 : i32
    return %c0_i32, %c0_i32_0 : i32, i32
  }
  func.func @transform_4(%arg0: i32) -> (i32, i32) {
    %c0_i32 = arith.constant 0 : i32
    %c0_i32_0 = arith.constant 0 : i32
    %c0_i32_1 = arith.constant 0 : i32
    return %c0_i32, %c0_i32_0 : i32, i32
  }
  func.func @transform_5(%arg0: i32) -> (i32, i32) {
    %c0_i32 = arith.constant 0 : i32
    %c0_i32_0 = arith.constant 0 : i32
    %c0_i32_1 = arith.constant 0 : i32
    return %c0_i32, %c0_i32_0 : i32, i32
  }
  func.func @transform_6(%arg0: i32) -> (i32, i32) {
    %c0_i32 = arith.constant 0 : i32
    %c0_i32_0 = arith.constant 0 : i32
    %c0_i32_1 = arith.constant 0 : i32
    return %c0_i32, %c0_i32_0 : i32, i32
  }
  func.func @transform_7(%arg0: i32) -> (i32, i32) {
    %c0_i32 = arith.constant 0 : i32
    %c0_i32_0 = arith.constant 0 : i32
    %c0_i32_1 = arith.constant 0 : i32
    return %c0_i32, %c0_i32_0 : i32, i32
  }
  func.func @transform_8(%arg0: i32) -> (i32, i32) {
    %c0_i32 = arith.constant 0 : i32
    %c0_i32_0 = arith.constant 0 : i32
    %c0_i32_1 = arith.constant 0 : i32
    return %c0_i32, %c0_i32_0 : i32, i32
  }
  func.func @transform_9(%arg0: i32) -> (i32, i32) {
    %c0_i32 = arith.constant 0 : i32
    %c0_i32_0 = arith.constant 0 : i32
    %c0_i32_1 = arith.constant 0 : i32
    return %c0_i32, %c0_i32_0 : i32, i32
  }
  func.func @transform_10(%arg0: i32) -> (i32, i32) {
    %c0_i32 = arith.constant 0 : i32
    %c0_i32_0 = arith.constant 0 : i32
    %c0_i32_1 = arith.constant 0 : i32
    return %c0_i32, %c0_i32_0 : i32, i32
  }
  func.func @transform_11(%arg0: i32) -> (i32, i32) {
    %c0_i32 = arith.constant 0 : i32
    %c0_i32_0 = arith.constant 0 : i32
    return %arg0, %c0_i32 : i32, i32
  }
}

</mosaic_0001>

<llo_original>
// kernel: tpu_custom_call.1
$region0: #{tpu_custom_call.1}
  #allocation0 [shape = 'u32[]', space=smem, size = 0x4, offset = 0x4, fixed_abs, tag = 'smem constant byte address 0x4 - core index']
  #allocation1 [shape = 'u32[72,128]{1,0:T(1,128)}', space=vmem, size = 0x9000, scoped, tag = 'internal scratch']
  %s0 = inlined_call_operand.hbm [shape: f32[16,16], index: 0, kind: input, shape index: {}]
  %s1 = inlined_call_operand.hbm [shape: bf16[16,128], index: 1, kind: input, shape index: {}]
  %s2 = inlined_call_operand.vmem [shape: f32[1,128], index: 2, kind: input, shape index: {}]
  %s3 = inlined_call_operand.hbm [shape: bf16[128,128], index: 3, kind: input, shape index: {}]
  %s4 = inlined_call_operand.vmem [shape: f32[1,128], index: 4, kind: input, shape index: {}]
  %s5 = inlined_call_operand.hbm [shape: bf16[128,128], index: 5, kind: input, shape index: {}]
  %s6 = inlined_call_operand.vmem [shape: f32[1,128], index: 6, kind: input, shape index: {}]
  %s7 = inlined_call_operand.hbm [shape: bf16[128,128], index: 7, kind: input, shape index: {}]
  %s8 = inlined_call_operand.vmem [shape: f32[1,128], index: 8, kind: input, shape index: {}]
  %s9 = inlined_call_operand.vmem [shape: f32[1,128], index: 9, kind: input, shape index: {}]
  %s10 = inlined_call_operand.vmem [shape: f32[1,128], index: 10, kind: input, shape index: {}]
  %s11 = inlined_call_operand.hbm [shape: f32[16,128], index: 11, kind: output, shape index: {}]
  %s12 = sld [smem:[#allocation0]]
  $region97: #{tpu_custom_call.1} parent=0
    _
  %s14 = ssub.s32 1, %s12
  %s15 = scalar_select 0, %s14, %s12
  $region1: #{tpu_custom_call.1} parent=0
    #allocation2 [shape = 'u8[8192]{0}', space=vmem, size = 0x2000, scoped, tag = 'input window, operand 0']
    #allocation3 [shape = 's32[2]{0}', space=sflag, size = 0x8, scoped, tag = 'scoped memory for tpu_custom_call.1']
    #allocation4 [shape = 's32[2]{0}', space=sflag, size = 0x8, scoped, tag = 'scoped memory for tpu_custom_call.1']
    #allocation5 [shape = 'u8[4096]{0}', space=vmem, size = 0x1000, scoped, tag = 'input window, operand 1, single buffered']
    #allocation6 [shape = 's32[1]{0}', space=sflag, size = 0x4, scoped, tag = 'scoped memory for tpu_custom_call.1']
    #allocation7 [shape = 'u8[32768]{0}', space=vmem, size = 0x8000, scoped, tag = 'input window, operand 3, single buffered']
    #allocation8 [shape = 'u8[32768]{0}', space=vmem, size = 0x8000, scoped, tag = 'input window, operand 5, single buffered']
    #allocation9 [shape = 's32[1]{0}', space=sflag, size = 0x4, scoped, tag = 'scoped memory for tpu_custom_call.1']
    #allocation10 [shape = 'u8[32768]{0}', space=vmem, size = 0x8000, scoped, tag = 'input window, operand 7, single buffered']
    #allocation11 [shape = 'u8[8192]{0}', space=vmem, size = 0x2000, scoped, tag = 'output window, operand 0']
    %16 = vsyncpa [#allocation3], 0
    %s17 = scalar_lea.sflag [#allocation3], 1
    %18 = vsyncpa %s17, 0
    %19 = vsyncpa [#allocation6], 0
    %20 = vsyncpa [#allocation9], 0
    %21 = vsyncpa [#allocation4], 0
    %s22 = scalar_lea.sflag [#allocation4], 1
    %23 = vsyncpa %s22, 0
    loop: start=0, step=1, limit=4
    $region2: #{tpu_custom_call.1} parent=1 // loop_pre_header
      _
    $region3: #{tpu_custom_call.1} parent=1 // loop_header
      %s25 = sphi 0, %s29
      %p26 = scmp.ge.s32.totalorder %s25, 4
      %s35 = sphi 0, %s37
      %s38 = sphi 0, %s35
      %s39 = sphi 0, %s38
      %s55 = sphi 0, %s39
      %s59 = sphi 0, %s59
      %s61 = sphi 0, %s59
      %s62 = sphi 0, %s61
      %s76 = sphi 0, %s62
      %s80 = sphi 0, %s80
      %s82 = sphi 0, %s80
      %s83 = sphi 0, %s82
      %s97 = sphi 0, %s83
      %s101 = sphi 0, %s101
      %s103 = sphi 0, %s101
      %s104 = sphi 0, %s103
      %s118 = sphi 0, %s104
      %s122 = sphi 0, %s122
      %s124 = sphi 0, %s122
      %s125 = sphi 0, %s124
      %s139 = sphi 0, %s125
      %s143 = sphi 0, %s143
      %s145 = sphi 0, %s143
      %s146 = sphi 0, %s145
      %s160 = sphi 0, %s146
      %s164 = sphi 0, %s164
      %s166 = sphi 0, %s164
      %s167 = sphi 0, %s166
      %s181 = sphi 0, %s167
      %s185 = sphi 0, %s185
      %s187 = sphi 0, %s185
      %s188 = sphi 0, %s187
      %s202 = sphi 0, %s188
      %s206 = sphi 0, %s206
      %s208 = sphi 0, %s206
      %s209 = sphi 0, %s208
      %s223 = sphi 0, %s209
      %s227 = sphi 0, %s227
      %s229 = sphi 0, %s227
      %s230 = sphi 0, %s229
      %s244 = sphi 0, %s230
      %s248 = sphi 0, %s248
      %s250 = sphi 0, %s248
      %s251 = sphi 0, %s250
      %s265 = sphi 0, %s251
      %s271 = sphi 0, %s273
      %s274 = sphi 0, %s271
      %s275 = sphi 0, %s274
      %s291 = sphi 0, %s275
    $region4: #{tpu_custom_call.1} parent=1 // loop_header_branch
      %28 = sbr.rel (%p26) target = $region8
    $region5: #{tpu_custom_call.1} parent=1 // loop_body
      %s30 = ssub.s32 %s25, 1
      %s31 = ssub.s32 %s25, 2
      %s32 = sadd.s32 %s25, 1
      %s33 = ssub.s32 %s25, %s32
      %p34 = scmp.eq.s32.totalorder %s33, 0
      %s36 = sadd.s32 %s35, 1
      %s37 = scalar_select %p34, %s35, %s36
      %p40 = pneg %p34
      %p41 = scmp.eq.s32.totalorder %s25, 1
      %p42 = por %p40, %p41
      %p43 = scmp.ne.s32.totalorder %s35, %s38
      %p44 = scmp.eq.s32.totalorder %s25, 0
      %p45 = por %p43, %p44
      %p46 = scmp.ne.s32.totalorder %s35, %s38
      %p47 = scmp.eq.s32.totalorder %s30, 1
      %p48 = por %p46, %p47
      %p49 = scmp.ne.s32.totalorder %s38, %s39
      %p50 = scmp.eq.s32.totalorder %s30, 0
      %p51 = por %p49, %p50
      %p52 = scmp.ne.s32.totalorder %s38, %s39
      %p53 = scmp.eq.s32.totalorder %s31, 1
      %p54 = por %p52, %p53
      %p56 = scmp.ne.s32.totalorder %s39, %s55
      %p57 = scmp.eq.s32.totalorder %s31, 0
      %p58 = por %p56, %p57
      %s60 = sadd.s32 %s59, 1
      %p63 = scmp.eq.s32.totalorder %s25, 1
      %p64 = scmp.ne.s32.totalorder %s59, %s61
      %p65 = scmp.eq.s32.totalorder %s25, 0
      %p66 = por %p64, %p65
      %p67 = scmp.ne.s32.totalorder %s59, %s61
      %p68 = scmp.eq.s32.totalorder %s30, 1
      %p69 = por %p67, %p68
      %p70 = scmp.ne.s32.totalorder %s61, %s62
      %p71 = scmp.eq.s32.totalorder %s30, 0
      %p72 = por %p70, %p71
      %p73 = scmp.ne.s32.totalorder %s61, %s62
      %p74 = scmp.eq.s32.totalorder %s31, 1
      %p75 = por %p73, %p74
      %p77 = scmp.ne.s32.totalorder %s62, %s76
      %p78 = scmp.eq.s32.totalorder %s31, 0
      %p79 = por %p77, %p78
      %s81 = sadd.s32 %s80, 1
      %p84 = scmp.eq.s32.totalorder %s25, 1
      %p85 = scmp.ne.s32.totalorder %s80, %s82
      %p86 = scmp.eq.s32.totalorder %s25, 0
      %p87 = por %p85, %p86
      %p88 = scmp.ne.s32.totalorder %s80, %s82
      %p89 = scmp.eq.s32.totalorder %s30, 1
      %p90 = por %p88, %p89
      %p91 = scmp.ne.s32.totalorder %s82, %s83
      %p92 = scmp.eq.s32.totalorder %s30, 0
      %p93 = por %p91, %p92
      %p94 = scmp.ne.s32.totalorder %s82, %s83
      %p95 = scmp.eq.s32.totalorder %s31, 1
      %p96 = por %p94, %p95
      %p98 = scmp.ne.s32.totalorder %s83, %s97
      %p99 = scmp.eq.s32.totalorder %s31, 0
      %p100 = por %p98, %p99
      %s102 = sadd.s32 %s101, 1
      %p105 = scmp.eq.s32.totalorder %s25, 1
      %p106 = scmp.ne.s32.totalorder %s101, %s103
      %p107 = scmp.eq.s32.totalorder %s25, 0
      %p108 = por %p106, %p107
      %p109 = scmp.ne.s32.totalorder %s101, %s103
      %p110 = scmp.eq.s32.totalorder %s30, 1
      %p111 = por %p109, %p110
      %p112 = scmp.ne.s32.totalorder %s103, %s104
      %p113 = scmp.eq.s32.totalorder %s30, 0
      %p114 = por %p112, %p113
      %p115 = scmp.ne.s32.totalorder %s103, %s104
      %p116 = scmp.eq.s32.totalorder %s31, 1
      %p117 = por %p115, %p116
      %p119 = scmp.ne.s32.totalorder %s104, %s118
      %p120 = scmp.eq.s32.totalorder %s31, 0
      %p121 = por %p119, %p120
      %s123 = sadd.s32 %s122, 1
      %p126 = scmp.eq.s32.totalorder %s25, 1
      %p127 = scmp.ne.s32.totalorder %s122, %s124
      %p128 = scmp.eq.s32.totalorder %s25, 0
      %p129 = por %p127, %p128
      %p130 = scmp.ne.s32.totalorder %s122, %s124
      %p131 = scmp.eq.s32.totalorder %s30, 1
      %p132 = por %p130, %p131
      %p133 = scmp.ne.s32.totalorder %s124, %s125
      %p134 = scmp.eq.s32.totalorder %s30, 0
      %p135 = por %p133, %p134
      %p136 = scmp.ne.s32.totalorder %s124, %s125
      %p137 = scmp.eq.s32.totalorder %s31, 1
      %p138 = por %p136, %p137
      %p140 = scmp.ne.s32.totalorder %s125, %s139
      %p141 = scmp.eq.s32.totalorder %s31, 0
      %p142 = por %p140, %p141
      %s144 = sadd.s32 %s143, 1
      %p147 = scmp.eq.s32.totalorder %s25, 1
      %p148 = scmp.ne.s32.totalorder %s143, %s145
      %p149 = scmp.eq.s32.totalorder %s25, 0
      %p150 = por %p148, %p149
      %p151 = scmp.ne.s32.totalorder %s143, %s145
      %p152 = scmp.eq.s32.totalorder %s30, 1
      %p153 = por %p151, %p152
      %p154 = scmp.ne.s32.totalorder %s145, %s146
      %p155 = scmp.eq.s32.totalorder %s30, 0
      %p156 = por %p154, %p155
      %p157 = scmp.ne.s32.totalorder %s145, %s146
      %p158 = scmp.eq.s32.totalorder %s31, 1
      %p159 = por %p157, %p158
      %p161 = scmp.ne.s32.totalorder %s146, %s160
      %p162 = scmp.eq.s32.totalorder %s31, 0
      %p163 = por %p161, %p162
      %s165 = sadd.s32 %s164, 1
      %p168 = scmp.eq.s32.totalorder %s25, 1
      %p169 = scmp.ne.s32.totalorder %s164, %s166
      %p170 = scmp.eq.s32.totalorder %s25, 0
      %p171 = por %p169, %p170
      %p172 = scmp.ne.s32.totalorder %s164, %s166
      %p173 = scmp.eq.s32.totalorder %s30, 1
      %p174 = por %p172, %p173
      %p175 = scmp.ne.s32.totalorder %s166, %s167
      %p176 = scmp.eq.s32.totalorder %s30, 0
      %p177 = por %p175, %p176
      %p178 = scmp.ne.s32.totalorder %s166, %s167
      %p179 = scmp.eq.s32.totalorder %s31, 1
      %p180 = por %p178, %p179
      %p182 = scmp.ne.s32.totalorder %s167, %s181
      %p183 = scmp.eq.s32.totalorder %s31, 0
      %p184 = por %p182, %p183
      %s186 = sadd.s32 %s185, 1
      %p189 = scmp.eq.s32.totalorder %s25, 1
      %p190 = scmp.ne.s32.totalorder %s185, %s187
      %p191 = scmp.eq.s32.totalorder %s25, 0
      %p192 = por %p190, %p191
      %p193 = scmp.ne.s32.totalorder %s185, %s187
      %p194 = scmp.eq.s32.totalorder %s30, 1
      %p195 = por %p193, %p194
      %p196 = scmp.ne.s32.totalorder %s187, %s188
      %p197 = scmp.eq.s32.totalorder %s30, 0
      %p198 = por %p196, %p197
      %p199 = scmp.ne.s32.totalorder %s187, %s188
      %p200 = scmp.eq.s32.totalorder %s31, 1
      %p201 = por %p199, %p200
      %p203 = scmp.ne.s32.totalorder %s188, %s202
      %p204 = scmp.eq.s32.totalorder %s31, 0
      %p205 = por %p203, %p204
      %s207 = sadd.s32 %s206, 1
      %p210 = scmp.eq.s32.totalorder %s25, 1
      %p211 = scmp.ne.s32.totalorder %s206, %s208
      %p212 = scmp.eq.s32.totalorder %s25, 0
      %p213 = por %p211, %p212
      %p214 = scmp.ne.s32.totalorder %s206, %s208
      %p215 = scmp.eq.s32.totalorder %s30, 1
      %p216 = por %p214, %p215
      %p217 = scmp.ne.s32.totalorder %s208, %s209
      %p218 = scmp.eq.s32.totalorder %s30, 0
      %p219 = por %p217, %p218
      %p220 = scmp.ne.s32.totalorder %s208, %s209
      %p221 = scmp.eq.s32.totalorder %s31, 1
      %p222 = por %p220, %p221
      %p224 = scmp.ne.s32.totalorder %s209, %s223
      %p225 = scmp.eq.s32.totalorder %s31, 0
      %p226 = por %p224, %p225
      %s228 = sadd.s32 %s227, 1
      %p231 = scmp.eq.s32.totalorder %s25, 1
      %p232 = scmp.ne.s32.totalorder %s227, %s229
      %p233 = scmp.eq.s32.totalorder %s25, 0
      %p234 = por %p232, %p233
      %p235 = scmp.ne.s32.totalorder %s227, %s229
      %p236 = scmp.eq.s32.totalorder %s30, 1
      %p237 = por %p235, %p236
      %p238 = scmp.ne.s32.totalorder %s229, %s230
      %p239 = scmp.eq.s32.totalorder %s30, 0
      %p240 = por %p238, %p239
      %p241 = scmp.ne.s32.totalorder %s229, %s230
      %p242 = scmp.eq.s32.totalorder %s31, 1
      %p243 = por %p241, %p242
      %p245 = scmp.ne.s32.totalorder %s230, %s244
      %p246 = scmp.eq.s32.totalorder %s31, 0
      %p247 = por %p245, %p246
      %s249 = sadd.s32 %s248, 1
      %p252 = scmp.eq.s32.totalorder %s25, 1
      %p253 = scmp.ne.s32.totalorder %s248, %s250
      %p254 = scmp.eq.s32.totalorder %s25, 0
      %p255 = por %p253, %p254
      %p256 = scmp.ne.s32.totalorder %s248, %s250
      %p257 = scmp.eq.s32.totalorder %s30, 1
      %p258 = por %p256, %p257
      %p259 = scmp.ne.s32.totalorder %s250, %s251
      %p260 = scmp.eq.s32.totalorder %s30, 0
      %p261 = por %p259, %p260
      %p262 = scmp.ne.s32.totalorder %s250, %s251
      %p263 = scmp.eq.s32.totalorder %s31, 1
      %p264 = por %p262, %p263
      %p266 = scmp.ne.s32.totalorder %s251, %s265
      %p267 = scmp.eq.s32.totalorder %s31, 0
      %p268 = por %p266, %p267
      %s269 = ssub.s32 %s25, %s32
      %p270 = scmp.eq.s32.totalorder %s269, 0
      %s272 = sadd.s32 %s271, 1
      %s273 = scalar_select %p270, %s271, %s272
      %p276 = pneg %p270
      %p277 = scmp.eq.s32.totalorder %s25, 1
      %p278 = por %p276, %p277
      %p279 = scmp.ne.s32.totalorder %s271, %s274
      %p280 = scmp.eq.s32.totalorder %s25, 0
      %p281 = por %p279, %p280
      %p282 = scmp.ne.s32.totalorder %s271, %s274
      %p283 = scmp.eq.s32.totalorder %s30, 1
      %p284 = por %p282, %p283
      %p285 = scmp.ne.s32.totalorder %s274, %s275
      %p286 = scmp.eq.s32.totalorder %s30, 0
      %p287 = por %p285, %p286
      %p288 = scmp.ne.s32.totalorder %s274, %s275
      %p289 = scmp.eq.s32.totalorder %s31, 1
      %p290 = por %p288, %p289
      %p292 = scmp.ne.s32.totalorder %s275, %s291
      %p293 = scmp.eq.s32.totalorder %s31, 0
      %p294 = por %p292, %p293
      %p295 = scmp.le.s32.totalorder 1, %s25
      %p296 = scmp.lt.s32.totalorder %s25, 3
      %p297 = pnand %p295, %p296
      %p298 = pneg %p297
      // Predicated region
      $region9: #{tpu_custom_call.1} parent=5 // pred_check
        _
      $region10: #{tpu_custom_call.1} parent=5 // pred_check_branch
        %300 = sbr.rel (%p297) target = $region12
      $region11: #{tpu_custom_call.1} parent=5 // pred_region
        %s301 = ssub.s32 %s25, 1
        // Predicated region
        $region13: #{tpu_custom_call.1} parent=11 // pred_check
          %p302 = pneg %p72
        $region14: #{tpu_custom_call.1} parent=11 // pred_check_branch
          %304 = sbr.rel (%p302) target = $region16
        $region15: #{tpu_custom_call.1} parent=11 // pred_region
          %306 = vsyncadd [#allocation6], 0
          %s307 = sshll.u32 %s1, 4
          %s308 = int_to_ptr.hbm [resolvable:$true] %s307
          %s309 = sshll.u32 [#allocation5], 4
          %s310 = int_to_ptr.vmem [resolvable:$true] %s309
          %315 = dma.hbm_to_vmem [thread:$0]  %s308, 128, %s310, [#allocation6], 64, 64, 4
        $region16: #{tpu_custom_call.1} parent=11 // pred_fallthru
          _
        // Predicated region
        $region17: #{tpu_custom_call.1} parent=11 // pred_check
          %p316 = pneg %p93
        $region18: #{tpu_custom_call.1} parent=11 // pred_check_branch
          %318 = sbr.rel (%p316) target = $region20
        $region19: #{tpu_custom_call.1} parent=11 // pred_region
          _
        $region20: #{tpu_custom_call.1} parent=11 // pred_fallthru
          _
        // Predicated region
        $region21: #{tpu_custom_call.1} parent=11 // pred_check
          %p319 = pneg %p114
        $region22: #{tpu_custom_call.1} parent=11 // pred_check_branch
          %321 = sbr.rel (%p319) target = $region24
        $region23: #{tpu_custom_call.1} parent=11 // pred_region
          %323 = vsyncadd [#allocation6], 0
          %s324 = sshll.u32 %s3, 4
          %s325 = int_to_ptr.hbm [resolvable:$true] %s324
          %s326 = sshll.u32 [#allocation7], 4
          %s327 = int_to_ptr.vmem [resolvable:$true] %s326
          %332 = dma.hbm_to_vmem [thread:$0]  %s325, 1024, %s327, [#allocation6], 64, 64, 4
        $region24: #{tpu_custom_call.1} parent=11 // pred_fallthru
          _
        // Predicated region
        $region25: #{tpu_custom_call.1} parent=11 // pred_check
          %p333 = pneg %p135
        $region26: #{tpu_custom_call.1} parent=11 // pred_check_branch
          %335 = sbr.rel (%p333) target = $region28
        $region27: #{tpu_custom_call.1} parent=11 // pred_region
          _
        $region28: #{tpu_custom_call.1} parent=11 // pred_fallthru
          _
        // Predicated region
        $region29: #{tpu_custom_call.1} parent=11 // pred_check
          %p336 = pneg %p156
        $region30: #{tpu_custom_call.1} parent=11 // pred_check_branch
          %338 = sbr.rel (%p336) target = $region32
        $region31: #{tpu_custom_call.1} parent=11 // pred_region
          %340 = vsyncadd [#allocation9], 0
          %s341 = sshll.u32 %s5, 4
          %s342 = int_to_ptr.hbm [resolvable:$true] %s341
          %s343 = sshll.u32 [#allocation8], 4
          %s344 = int_to_ptr.vmem [resolvable:$true] %s343
          %349 = dma.hbm_to_vmem [thread:$0]  %s342, 1024, %s344, [#allocation9], 64, 64, 4
        $region32: #{tpu_custom_call.1} parent=11 // pred_fallthru
          _
        // Predicated region
        $region33: #{tpu_custom_call.1} parent=11 // pred_check
          %p350 = pneg %p177
        $region34: #{tpu_custom_call.1} parent=11 // pred_check_branch
          %352 = sbr.rel (%p350) target = $region36
        $region35: #{tpu_custom_call.1} parent=11 // pred_region
          _
        $region36: #{tpu_custom_call.1} parent=11 // pred_fallthru
          _
        // Predicated region
        $region37: #{tpu_custom_call.1} parent=11 // pred_check
          %p353 = pneg %p198
        $region38: #{tpu_custom_call.1} parent=11 // pred_check_branch
          %355 = sbr.rel (%p353) target = $region40
        $region39: #{tpu_custom_call.1} parent=11 // pred_region
          %357 = vsyncadd [#allocation9], 0
          %s358 = sshll.u32 %s7, 4
          %s359 = int_to_ptr.hbm [resolvable:$true] %s358
          %s360 = sshll.u32 [#allocation10], 4
          %s361 = int_to_ptr.vmem [resolvable:$true] %s360
          %366 = dma.hbm_to_vmem [thread:$0]  %s359, 1024, %s361, [#allocation9], 64, 64, 4
        $region40: #{tpu_custom_call.1} parent=11 // pred_fallthru
          _
        // Predicated region
        $region41: #{tpu_custom_call.1} parent=11 // pred_check
          %p367 = pneg %p219
        $region42: #{tpu_custom_call.1} parent=11 // pred_check_branch
          %369 = sbr.rel (%p367) target = $region44
        $region43: #{tpu_custom_call.1} parent=11 // pred_region
          _
        $region44: #{tpu_custom_call.1} parent=11 // pred_fallthru
          _
        // Predicated region
        $region45: #{tpu_custom_call.1} parent=11 // pred_check
          %p370 = pneg %p240
        $region46: #{tpu_custom_call.1} parent=11 // pred_check_branch
          %372 = sbr.rel (%p370) target = $region48
        $region47: #{tpu_custom_call.1} parent=11 // pred_region
          _
        $region48: #{tpu_custom_call.1} parent=11 // pred_fallthru
          _
        // Predicated region
        $region49: #{tpu_custom_call.1} parent=11 // pred_check
          %p373 = pneg %p261
        $region50: #{tpu_custom_call.1} parent=11 // pred_check_branch
          %375 = sbr.rel (%p373) target = $region52
        $region51: #{tpu_custom_call.1} parent=11 // pred_region
          _
        $region52: #{tpu_custom_call.1} parent=11 // pred_fallthru
          _
      $region12: #{tpu_custom_call.1} parent=5 // pred_fallthru
        _
      %p376 = scmp.lt.s32.totalorder %s25, 2
      // Predicated region
      $region53: #{tpu_custom_call.1} parent=5 // pred_check
        %p377 = pneg %p376
      $region54: #{tpu_custom_call.1} parent=5 // pred_check_branch
        %379 = sbr.rel (%p377) target = $region56
      $region55: #{tpu_custom_call.1} parent=5 // pred_region
        // Predicated region
        $region57: #{tpu_custom_call.1} parent=55 // pred_check
          %p380 = pneg %p45
        $region58: #{tpu_custom_call.1} parent=55 // pred_check_branch
          %382 = sbr.rel (%p380) target = $region60
        $region59: #{tpu_custom_call.1} parent=55 // pred_region
          %s383 = sand.u32 %s35, 1
          %s384 = scalar_lea.sflag [#allocation3], %s383
          %s385 = sand.u32 %s35, 1
          %s386 = smul.addr %s385, 8
          %s387 = scalar_lea.vmem [#allocation2], %s386
          %389 = vsyncadd %s384, 0
          %s390 = smul.addr %s25, 8
          %s391 = scalar_lea.hbm %s0, %s390
          %s393 = sshll.u32 %s391, 4
          %s394 = int_to_ptr.hbm [resolvable:$true] %s393
          %s395 = sshll.u32 %s387, 4
          %s396 = int_to_ptr.vmem [resolvable:$true] %s395
          %398 = dma.hbm_to_vmem [thread:$0]  %s394, 128, %s396, %s384
        $region60: #{tpu_custom_call.1} parent=55 // pred_fallthru
          _
      $region56: #{tpu_custom_call.1} parent=5 // pred_fallthru
        _
      %p399 = scmp.le.s32.totalorder 1, %s25
      %p400 = scmp.lt.s32.totalorder %s25, 3
      %p401 = pnand %p399, %p400
      %p402 = pneg %p401
      // Predicated region
      $region61: #{tpu_custom_call.1} parent=5 // pred_check
        _
      $region62: #{tpu_custom_call.1} parent=5 // pred_check_branch
        %404 = sbr.rel (%p401) target = $region64
      $region63: #{tpu_custom_call.1} parent=5 // pred_region
        %s405 = ssub.s32 %s25, 1
        %s406 = sand.u32 %s38, 1
        %s407 = scalar_lea.sflag [#allocation3], %s406
        %s408 = sand.u32 %s38, 1
        %s409 = smul.addr %s408, 8
        %s410 = scalar_lea.vmem [#allocation2], %s409
        // Predicated region
        $region65: #{tpu_custom_call.1} parent=63 // pred_check
          %p411 = pneg %p51
        $region66: #{tpu_custom_call.1} parent=63 // pred_check_branch
          %413 = sbr.rel (%p411) target = $region68
        $region67: #{tpu_custom_call.1} parent=63 // pred_region
          %415 = dma.done %s407, 128
        $region68: #{tpu_custom_call.1} parent=63 // pred_fallthru
          _
        // Predicated region
        $region69: #{tpu_custom_call.1} parent=63 // pred_check
          %p416 = pneg %p72
        $region70: #{tpu_custom_call.1} parent=63 // pred_check_branch
          %418 = sbr.rel (%p416) target = $region72
        $region71: #{tpu_custom_call.1} parent=63 // pred_region
          %420 = dma.done [#allocation6], 128
        $region72: #{tpu_custom_call.1} parent=63 // pred_fallthru
          _
        // Predicated region
        $region73: #{tpu_custom_call.1} parent=63 // pred_check
          %p421 = pneg %p114
        $region74: #{tpu_custom_call.1} parent=63 // pred_check_branch
          %423 = sbr.rel (%p421) target = $region76
        $region75: #{tpu_custom_call.1} parent=63 // pred_region
          %425 = dma.done [#allocation6], 1024
        $region76: #{tpu_custom_call.1} parent=63 // pred_fallthru
          _
        // Predicated region
        $region77: #{tpu_custom_call.1} parent=63 // pred_check
          %p426 = pneg %p156
        $region78: #{tpu_custom_call.1} parent=63 // pred_check_branch
          %428 = sbr.rel (%p426) target = $region80
        $region79: #{tpu_custom_call.1} parent=63 // pred_region
          %430 = dma.done [#allocation9], 1024
        $region80: #{tpu_custom_call.1} parent=63 // pred_fallthru
          _
        // Predicated region
        $region81: #{tpu_custom_call.1} parent=63 // pred_check
          %p431 = pneg %p198
        $region82: #{tpu_custom_call.1} parent=63 // pred_check_branch
          %433 = sbr.rel (%p431) target = $region84
        $region83: #{tpu_custom_call.1} parent=63 // pred_region
          %435 = dma.done [#allocation9], 1024
        $region84: #{tpu_custom_call.1} parent=63 // pred_fallthru
          _
        %s436 = sand.u32 %s38, 1
        %s437 = scalar_lea.sflag [#allocation3], %s436
        %s438 = sand.u32 %s38, 1
        %s439 = smul.addr %s438, 8
        %s440 = scalar_lea.vmem [#allocation2], %s439
        %p441 = pneg %p51
        %p442 = pneg %p48
        %p443 = pneg %p72
        %p444 = pneg %p69
        %p445 = pneg %p93
        %p446 = pneg %p90
        %p447 = pneg %p114
        %p448 = pneg %p111
        %p449 = pneg %p135
        %p450 = pneg %p132
        %p451 = pneg %p156
        %p452 = pneg %p153
        %p453 = pneg %p177
        %p454 = pneg %p174
        %p455 = pneg %p198
        %p456 = pneg %p195
        %p457 = pneg %p219
        %p458 = pneg %p216
        %p459 = pneg %p240
        %p460 = pneg %p237
        %p461 = pneg %p261
        %p462 = pneg %p258
        %p463 = pneg %p287
        %p464 = pneg %p284
        %s465 = sand.u32 %s274, 1
        %s466 = scalar_lea.sflag [#allocation4], %s465
        %s467 = sand.u32 %s274, 1
        %s468 = smul.addr %s467, 8
        %s469 = scalar_lea.vmem [#allocation11], %s468
        %v471 = vld [vmem:[%s410] sm:$0xff]
        %v472 = vpack.c.bf16 %v471, %v471
        %v473 = vld [vmem:[#allocation5] sm:$0xf]
        %v474 = vld [vmem:[#allocation5 + $0x4] sm:$0xf]
        %v475 = vld [vmem:[%s2] sm:$0x1]
        %v477 = vperm.slane %v475, 0
        %v481 = vunpack.c.l.b16 %v473
        %v482 = vunpack.c.l.b16 %v474
        %v483 = vpack.c.b16 %v482, %v481
        %vm485 = vcmask 130048
        %v487 = vsel %vm485, %v472, 0
        %489 = vmatpush.bf16.msra.mxu0 0
        %490 = vmatpush.bf16.msra.mxu0 0
        %491 = vmatpush.bf16.msra.mxu0 0
        %492 = vmatpush.bf16.msra.mxu0 0
        %493 = vmatpush.bf16.msra.mxu0 0
        %494 = vmatpush.bf16.msra.mxu0 0
        %495 = vmatpush.bf16.msra.mxu0 0
        %496 = vmatpush.bf16.msra.mxu0 %v483
        %497 = vmatmul.bf16.gmra.mxu0 %v487
        %v498 = vpop.f32.mrf.mxu0
        %v499 = vadd.f32 %v477, %v498
        %v500 = vpop.f32.mrf.mxu0
        %501 = vdwg.mxu0
        %v502 = vmax.f32 %v499, 0.0
        %v503 = vpack.c.bf16 %v502, %v502
        %v504 = vld [vmem:[#allocation7] sm:$0xf]
        %v505 = vld [vmem:[#allocation7 + $0x4] sm:$0xf]
        %v506 = vld [vmem:[#allocation7 + $0x8] sm:$0xf]
        %v507 = vld [vmem:[#allocation7 + $0xc] sm:$0xf]
        %v508 = vld [vmem:[#allocation7 + $0x10] sm:$0xf]
        %v509 = vld [vmem:[#allocation7 + $0x14] sm:$0xf]
        %v510 = vld [vmem:[#allocation7 + $0x18] sm:$0xf]
        %v511 = vld [vmem:[#allocation7 + $0x1c] sm:$0xf]
        %v512 = vld [vmem:[#allocation7 + $0x20] sm:$0xf]
        %v513 = vld [vmem:[#allocation7 + $0x24] sm:$0xf]
        %v514 = vld [vmem:[#allocation7 + $0x28] sm:$0xf]
        %v515 = vld [vmem:[#allocation7 + $0x2c] sm:$0xf]
        %v516 = vld [vmem:[#allocation7 + $0x30] sm:$0xf]
        %v517 = vld [vmem:[#allocation7 + $0x34] sm:$0xf]
        %v518 = vld [vmem:[#allocation7 + $0x38] sm:$0xf]
        %v519 = vld [vmem:[#allocation7 + $0x3c] sm:$0xf]
        %v520 = vld [vmem:[%s4] sm:$0x1]
        %v522 = vperm.slane %v520, 0
        %v540 = vunpack.c.l.b16 %v504
        %v541 = vunpack.c.l.b16 %v505
        %v542 = vunpack.c.l.b16 %v506
        %v543 = vunpack.c.l.b16 %v507
        %v544 = vunpack.c.l.b16 %v508
        %v545 = vunpack.c.l.b16 %v509
        %v546 = vunpack.c.l.b16 %v510
        %v547 = vunpack.c.l.b16 %v511
        %v548 = vunpack.c.l.b16 %v512
        %v549 = vunpack.c.l.b16 %v513
        %v550 = vunpack.c.l.b16 %v514
        %v551 = vunpack.c.l.b16 %v515
        %v552 = vunpack.c.l.b16 %v516
        %v553 = vunpack.c.l.b16 %v517
        %v554 = vunpack.c.l.b16 %v518
        %v555 = vunpack.c.l.b16 %v519
        %v556 = vpack.c.b16 %v541, %v540
        %v557 = vpack.c.b16 %v543, %v542
        %v558 = vpack.c.b16 %v545, %v544
        %v559 = vpack.c.b16 %v547, %v546
        %v560 = vpack.c.b16 %v549, %v548
        %v561 = vpack.c.b16 %v551, %v550
        %v562 = vpack.c.b16 %v553, %v552
        %v563 = vpack.c.b16 %v555, %v554
        %572 = vmatpush.bf16.msra.mxu0 %v563
        %573 = vmatpush.bf16.msra.mxu0 %v562
        %574 = vmatpush.bf16.msra.mxu0 %v561
        %575 = vmatpush.bf16.msra.mxu0 %v560
        %576 = vmatpush.bf16.msra.mxu0 %v559
        %577 = vmatpush.bf16.msra.mxu0 %v558
        %578 = vmatpush.bf16.msra.mxu0 %v557
        %579 = vmatpush.bf16.msra.mxu0 %v556
        %580 = vmatmul.bf16.gmra.mxu0 %v503
        %v581 = vpop.f32.mrf.mxu0
        %v582 = vadd.f32 %v522, %v581
        %v583 = vpop.f32.mrf.mxu0
        %584 = vdwg.mxu0
        %v585 = vmax.f32 %v582, 0.0
        %v586 = vpack.c.bf16 %v585, %v585
        %v587 = vld [vmem:[#allocation8] sm:$0xf]
        %v588 = vld [vmem:[#allocation8 + $0x4] sm:$0xf]
        %v589 = vld [vmem:[#allocation8 + $0x8] sm:$0xf]
        %v590 = vld [vmem:[#allocation8 + $0xc] sm:$0xf]
        %v591 = vld [vmem:[#allocation8 + $0x10] sm:$0xf]
        %v592 = vld [vmem:[#allocation8 + $0x14] sm:$0xf]
        %v593 = vld [vmem:[#allocation8 + $0x18] sm:$0xf]
        %v594 = vld [vmem:[#allocation8 + $0x1c] sm:$0xf]
        %v595 = vld [vmem:[#allocation8 + $0x20] sm:$0xf]
        %v596 = vld [vmem:[#allocation8 + $0x24] sm:$0xf]
        %v597 = vld [vmem:[#allocation8 + $0x28] sm:$0xf]
        %v598 = vld [vmem:[#allocation8 + $0x2c] sm:$0xf]
        %v599 = vld [vmem:[#allocation8 + $0x30] sm:$0xf]
        %v600 = vld [vmem:[#allocation8 + $0x34] sm:$0xf]
        %v601 = vld [vmem:[#allocation8 + $0x38] sm:$0xf]
        %v602 = vld [vmem:[#allocation8 + $0x3c] sm:$0xf]
        %v603 = vld [vmem:[%s6] sm:$0x1]
        %v605 = vperm.slane %v603, 0
        %v623 = vunpack.c.l.b16 %v587
        %v624 = vunpack.c.l.b16 %v588
        %v625 = vunpack.c.l.b16 %v589
        %v626 = vunpack.c.l.b16 %v590
        %v627 = vunpack.c.l.b16 %v591
        %v628 = vunpack.c.l.b16 %v592
        %v629 = vunpack.c.l.b16 %v593
        %v630 = vunpack.c.l.b16 %v594
        %v631 = vunpack.c.l.b16 %v595
        %v632 = vunpack.c.l.b16 %v596
        %v633 = vunpack.c.l.b16 %v597
        %v634 = vunpack.c.l.b16 %v598
        %v635 = vunpack.c.l.b16 %v599
        %v636 = vunpack.c.l.b16 %v600
        %v637 = vunpack.c.l.b16 %v601
        %v638 = vunpack.c.l.b16 %v602
        %v639 = vpack.c.b16 %v624, %v623
        %v640 = vpack.c.b16 %v626, %v625
        %v641 = vpack.c.b16 %v628, %v627
        %v642 = vpack.c.b16 %v630, %v629
        %v643 = vpack.c.b16 %v632, %v631
        %v644 = vpack.c.b16 %v634, %v633
        %v645 = vpack.c.b16 %v636, %v635
        %v646 = vpack.c.b16 %v638, %v637
        %655 = vmatpush.bf16.msra.mxu0 %v646
        %656 = vmatpush.bf16.msra.mxu0 %v645
        %657 = vmatpush.bf16.msra.mxu0 %v644
        %658 = vmatpush.bf16.msra.mxu0 %v643
        %659 = vmatpush.bf16.msra.mxu0 %v642
        %660 = vmatpush.bf16.msra.mxu0 %v641
        %661 = vmatpush.bf16.msra.mxu0 %v640
        %662 = vmatpush.bf16.msra.mxu0 %v639
        %663 = vmatmul.bf16.gmra.mxu0 %v586
        %v664 = vpop.f32.mrf.mxu0
        %v665 = vadd.f32 %v605, %v664
        %v666 = vpop.f32.mrf.mxu0
        %667 = vdwg.mxu0
        %v668 = vmax.f32 %v665, 0.0
        %v669 = vpack.c.bf16 %v668, %v668
        %v670 = vld [vmem:[#allocation10] sm:$0xf]
        %v671 = vld [vmem:[#allocation10 + $0x4] sm:$0xf]
        %v672 = vld [vmem:[#allocation10 + $0x8] sm:$0xf]
        %v673 = vld [vmem:[#allocation10 + $0xc] sm:$0xf]
        %v674 = vld [vmem:[#allocation10 + $0x10] sm:$0xf]
        %v675 = vld [vmem:[#allocation10 + $0x14] sm:$0xf]
        %v676 = vld [vmem:[#allocation10 + $0x18] sm:$0xf]
        %v677 = vld [vmem:[#allocation10 + $0x1c] sm:$0xf]
        %v678 = vld [vmem:[#allocation10 + $0x20] sm:$0xf]
        %v679 = vld [vmem:[#allocation10 + $0x24] sm:$0xf]
        %v680 = vld [vmem:[#allocation10 + $0x28] sm:$0xf]
        %v681 = vld [vmem:[#allocation10 + $0x2c] sm:$0xf]
        %v682 = vld [vmem:[#allocation10 + $0x30] sm:$0xf]
        %v683 = vld [vmem:[#allocation10 + $0x34] sm:$0xf]
        %v684 = vld [vmem:[#allocation10 + $0x38] sm:$0xf]
        %v685 = vld [vmem:[#allocation10 + $0x3c] sm:$0xf]
        %v686 = vld [vmem:[%s8] sm:$0x1]
        %v688 = vperm.slane %v686, 0
        %v706 = vunpack.c.l.b16 %v670
        %v707 = vunpack.c.l.b16 %v671
        %v708 = vunpack.c.l.b16 %v672
        %v709 = vunpack.c.l.b16 %v673
        %v710 = vunpack.c.l.b16 %v674
        %v711 = vunpack.c.l.b16 %v675
        %v712 = vunpack.c.l.b16 %v676
        %v713 = vunpack.c.l.b16 %v677
        %v714 = vunpack.c.l.b16 %v678
        %v715 = vunpack.c.l.b16 %v679
        %v716 = vunpack.c.l.b16 %v680
        %v717 = vunpack.c.l.b16 %v681
        %v718 = vunpack.c.l.b16 %v682
        %v719 = vunpack.c.l.b16 %v683
        %v720 = vunpack.c.l.b16 %v684
        %v721 = vunpack.c.l.b16 %v685
        %v722 = vpack.c.b16 %v707, %v706
        %v723 = vpack.c.b16 %v709, %v708
        %v724 = vpack.c.b16 %v711, %v710
        %v725 = vpack.c.b16 %v713, %v712
        %v726 = vpack.c.b16 %v715, %v714
        %v727 = vpack.c.b16 %v717, %v716
        %v728 = vpack.c.b16 %v719, %v718
        %v729 = vpack.c.b16 %v721, %v720
        %738 = vmatpush.bf16.msra.mxu0 %v729
        %739 = vmatpush.bf16.msra.mxu0 %v728
        %740 = vmatpush.bf16.msra.mxu0 %v727
        %741 = vmatpush.bf16.msra.mxu0 %v726
        %742 = vmatpush.bf16.msra.mxu0 %v725
        %743 = vmatpush.bf16.msra.mxu0 %v724
        %744 = vmatpush.bf16.msra.mxu0 %v723
        %745 = vmatpush.bf16.msra.mxu0 %v722
        %746 = vmatmul.bf16.gmra.mxu0 %v669
        %v747 = vpop.f32.mrf.mxu0
        %v748 = vadd.f32 %v688, %v747
        %v749 = vpop.f32.mrf.mxu0
        %750 = vdwg.mxu0
        %751 = vadd.xlane.f32.xlu0 %v748
        %v752 = vpop.xlane.xlu0 %751
        %v753 = vmul.f32 %v752, 0.0625
        %v754 = vmul.f32 %v748, %v748
        %755 = vadd.xlane.f32.xlu0 %v754
        %v756 = vpop.xlane.xlu0 %755
        %v757 = vmul.f32 %v756, 0.0625
        %v758 = vmul.f32 %v753, %v753
        %v759 = vsub.f32 %v757, %v758
        %v760 = vmax.f32 %v759, 0.0
        %v761 = vsub.f32 %v748, %v753
        %v762 = vadd.f32 %v760, 1e-05
        %v763 = vrsqrt.pop %v762
        %v764 = vmul.f32 %v763, %v762
        %v765 = vmul.f32 %v764, %v763
        %v766 = vmul.f32 0.5, %v765
        %v767 = vsub.f32 1.5, %v766
        %v768 = vmul.f32 %v763, %v767
        %vm769 = vweird.f32 %v762
        %vm770 = vweird.f32 %v763
        %vm771 = vmor %vm769, %vm770
        %v772 = vsel %vm771, %v763, %v768
        %v773 = vmul.f32 %v761, %v772
        %v774 = vld [vmem:[%s9] sm:$0x1]
        %v776 = vperm.slane %v774, 0
        %v778 = vmul.f32 %v773, %v776
        %v779 = vld [vmem:[%s10] sm:$0x1]
        %v781 = vperm.slane %v779, 0
        %v783 = vadd.f32 %v778, %v781
        %784 = vst [vmem:[%s469] sm:$0xff] %v783
        %s785 = sand.u32 %s274, 1
        %s786 = scalar_lea.sflag [#allocation4], %s785
        %s787 = sand.u32 %s274, 1
        %s788 = smul.addr %s787, 8
        %s789 = scalar_lea.vmem [#allocation11], %s788
        // Predicated region
        $region85: #{tpu_custom_call.1} parent=63 // pred_check
          %p790 = pneg %p284
        $region86: #{tpu_custom_call.1} parent=63 // pred_check_branch
          %792 = sbr.rel (%p790) target = $region88
        $region87: #{tpu_custom_call.1} parent=63 // pred_region
          %794 = vsyncadd %s786, 0
          %s795 = smul.addr %s30, 8
          %s796 = scalar_lea.hbm %s11, %s795
          %s798 = sshll.u32 %s789, 4
          %s799 = int_to_ptr.vmem [resolvable:$true] %s798
          %s800 = sshll.u32 %s796, 4
          %s801 = int_to_ptr.hbm [resolvable:$true] %s800
          %803 = dma.vmem_to_hbm [thread:$0]  %s799, 128, %s801, %s786
        $region88: #{tpu_custom_call.1} parent=63 // pred_fallthru
          _
      $region64: #{tpu_custom_call.1} parent=5 // pred_fallthru
        _
      %p804 = scmp.le.s32.totalorder 2, %s25
      // Predicated region
      $region89: #{tpu_custom_call.1} parent=5 // pred_check
        %p805 = pneg %p804
      $region90: #{tpu_custom_call.1} parent=5 // pred_check_branch
        %807 = sbr.rel (%p805) target = $region92
      $region91: #{tpu_custom_call.1} parent=5 // pred_region
        %s808 = ssub.s32 %s25, 2
        // Predicated region
        $region93: #{tpu_custom_call.1} parent=91 // pred_check
          %p809 = pneg %p290
        $region94: #{tpu_custom_call.1} parent=91 // pred_check_branch
          %811 = sbr.rel (%p809) target = $region96
        $region95: #{tpu_custom_call.1} parent=91 // pred_region
          %s812 = sand.u32 %s275, 1
          %s813 = scalar_lea.sflag [#allocation4], %s812
          %s814 = sand.u32 %s275, 1
          %s815 = smul.addr %s814, 8
          %s816 = scalar_lea.vmem [#allocation11], %s815
          %818 = dma.done %s813, 128
        $region96: #{tpu_custom_call.1} parent=91 // pred_fallthru
          _
      $region92: #{tpu_custom_call.1} parent=5 // pred_fallthru
        _
    $region6: #{tpu_custom_call.1} parent=1 // loop_footer
      %s29 = sadd.s32 1, %s25
    $region7: #{tpu_custom_call.1} parent=1 // loop_footer_branch
      %24 = sbr.rel target = $region3
    $region8: #{tpu_custom_call.1} parent=1 // loop_exit
      _
    %819 = vsyncpa [#allocation3], 1
    %s820 = scalar_lea.sflag [#allocation3], 1
    %821 = vsyncpa %s820, 1
    %822 = vsyncpa [#allocation6], 1
    %823 = vsyncpa [#allocation9], 1
    %824 = vsyncpa [#allocation4], 1
    %s825 = scalar_lea.sflag [#allocation4], 1
    %826 = vsyncpa %s825, 1

// kernel: tpu_custom_call.1
$region0: #{tpu_custom_call.1}
  #allocation0 [shape = 'u32[]', space=smem, size = 0x4, offset = 0x4, fixed_abs, tag = 'smem constant byte address 0x4 - core index']
  #allocation1 [shape = 'u32[72,128]{1,0:T(1,128)}', space=vmem, size = 0x9000, scoped, tag = 'internal scratch']
  %s0 = inlined_call_operand.hbm [shape: f32[16,16], index: 0, kind: input, shape index: {}]
  %s1 = inlined_call_operand.hbm [shape: bf16[16,128], index: 1, kind: input, shape index: {}]
  %s2 = inlined_call_operand.vmem [shape: f32[1,128], index: 2, kind: input, shape index: {}]
  %s3 = inlined_call_operand.hbm [shape: bf16[128,128], index: 3, kind: input, shape index: {}]
  %s4 = inlined_call_operand.vmem [shape: f32[1,128], index: 4, kind: input, shape index: {}]
  %s5 = inlined_call_operand.hbm [shape: bf16[128,128], index: 5, kind: input, shape index: {}]
  %s6 = inlined_call_operand.vmem [shape: f32[1,128], index: 6, kind: input, shape index: {}]
  %s7 = inlined_call_operand.hbm [shape: bf16[128,128], index: 7, kind: input, shape index: {}]
  %s8 = inlined_call_operand.vmem [shape: f32[1,128], index: 8, kind: input, shape index: {}]
  %s9 = inlined_call_operand.vmem [shape: f32[1,128], index: 9, kind: input, shape index: {}]
  %s10 = inlined_call_operand.vmem [shape: f32[1,128], index: 10, kind: input, shape index: {}]
  %s11 = inlined_call_operand.hbm [shape: f32[16,128], index: 11, kind: output, shape index: {}]
  %s12 = sld [smem:[#allocation0]]
  $region97: #{tpu_custom_call.1} parent=0
    _
  %s14 = ssub.s32 1, %s12
  %s15 = scalar_select 0, %s14, %s12
  $region1: #{tpu_custom_call.1} parent=0
    #allocation2 [shape = 'u8[8192]{0}', space=vmem, size = 0x2000, scoped, tag = 'input window, operand 0']
    #allocation3 [shape = 's32[2]{0}', space=sflag, size = 0x8, scoped, tag = 'scoped memory for tpu_custom_call.1']
    #allocation4 [shape = 's32[2]{0}', space=sflag, size = 0x8, scoped, tag = 'scoped memory for tpu_custom_call.1']
    #allocation5 [shape = 'u8[4096]{0}', space=vmem, size = 0x1000, scoped, tag = 'input window, operand 1, single buffered']
    #allocation6 [shape = 's32[1]{0}', space=sflag, size = 0x4, scoped, tag = 'scoped memory for tpu_custom_call.1']
    #allocation7 [shape = 'u8[32768]{0}', space=vmem, size = 0x8000, scoped, tag = 'input window, operand 3, single buffered']
    #allocation8 [shape = 'u8[32768]{0}', space=vmem, size = 0x8000, scoped, tag = 'input window, operand 5, single buffered']
    #allocation9 [shape = 's32[1]{0}', space=sflag, size = 0x4, scoped, tag = 'scoped memory for tpu_custom_call.1']
    #allocation10 [shape = 'u8[32768]{0}', space=vmem, size = 0x8000, scoped, tag = 'input window, operand 7, single buffered']
    #allocation11 [shape = 'u8[8192]{0}', space=vmem, size = 0x2000, scoped, tag = 'output window, operand 0']
    %16 = vsyncpa [#allocation3], 0
    %s17 = scalar_lea.sflag [#allocation3], 1
    %18 = vsyncpa %s17, 0
    %19 = vsyncpa [#allocation6], 0
    %20 = vsyncpa [#allocation9], 0
    %21 = vsyncpa [#allocation4], 0
    %s22 = scalar_lea.sflag [#allocation4], 1
    %23 = vsyncpa %s22, 0
    loop: start=0, step=1, limit=4
    $region2: #{tpu_custom_call.1} parent=1 // loop_pre_header
      _
    $region3: #{tpu_custom_call.1} parent=1 // loop_header
      %s25 = sphi 0, %s29
      %p26 = scmp.ge.s32.totalorder %s25, 4
      %s35 = sphi 0, %s37
      %s38 = sphi 0, %s35
      %s39 = sphi 0, %s38
      %s55 = sphi 0, %s39
      %s59 = sphi 0, %s59
      %s61 = sphi 0, %s59
      %s62 = sphi 0, %s61
      %s76 = sphi 0, %s62
      %s80 = sphi 0, %s80
      %s82 = sphi 0, %s80
      %s83 = sphi 0, %s82
      %s97 = sphi 0, %s83
      %s101 = sphi 0, %s101
      %s103 = sphi 0, %s101
      %s104 = sphi 0, %s103
      %s118 = sphi 0, %s104
      %s122 = sphi 0, %s122
      %s124 = sphi 0, %s122
      %s125 = sphi 0, %s124
      %s139 = sphi 0, %s125
      %s143 = sphi 0, %s143
      %s145 = sphi 0, %s143
      %s146 = sphi 0, %s145
      %s160 = sphi 0, %s146
      %s164 = sphi 0, %s164
      %s166 = sphi 0, %s164
      %s167 = sphi 0, %s166
      %s181 = sphi 0, %s167
      %s185 = sphi 0, %s185
      %s187 = sphi 0, %s185
      %s188 = sphi 0, %s187
      %s202 = sphi 0, %s188
      %s206 = sphi 0, %s206
      %s208 = sphi 0, %s206
      %s209 = sphi 0, %s208
      %s223 = sphi 0, %s209
      %s227 = sphi 0, %s227
      %s229 = sphi 0, %s227
      %s230 = sphi 0, %s229
      %s244 = sphi 0, %s230
      %s248 = sphi 0, %s248
      %s250 = sphi 0, %s248
      %s251 = sphi 0, %s250
      %s265 = sphi 0, %s251
      %s271 = sphi 0, %s273
      %s274 = sphi 0, %s271
      %s275 = sphi 0, %s274
      %s291 = sphi 0, %s275
    $region4: #{tpu_custom_call.1} parent=1 // loop_header_branch
      %28 = sbr.rel (%p26) target = $region8
    $region5: #{tpu_custom_call.1} parent=1 // loop_body
      %s30 = ssub.s32 %s25, 1
      %s31 = ssub.s32 %s25, 2
      %s32 = sadd.s32 %s25, 1
      %s33 = ssub.s32 %s25, %s32
      %p34 = scmp.eq.s32.totalorder %s33, 0
      %s36 = sadd.s32 %s35, 1
      %s37 = scalar_select %p34, %s35, %s36
      %p40 = pneg %p34
      %p41 = scmp.eq.s32.totalorder %s25, 1
      %p42 = por %p40, %p41
      %p43 = scmp.ne.s32.totalorder %s35, %s38
      %p44 = scmp.eq.s32.totalorder %s25, 0
      %p45 = por %p43, %p44
      %p46 = scmp.ne.s32.totalorder %s35, %s38
      %p47 = scmp.eq.s32.totalorder %s30, 1
      %p48 = por %p46, %p47
      %p49 = scmp.ne.s32.totalorder %s38, %s39
      %p50 = scmp.eq.s32.totalorder %s30, 0
      %p51 = por %p49, %p50
      %p52 = scmp.ne.s32.totalorder %s38, %s39
      %p53 = scmp.eq.s32.totalorder %s31, 1
      %p54 = por %p52, %p53
      %p56 = scmp.ne.s32.totalorder %s39, %s55
      %p57 = scmp.eq.s32.totalorder %s31, 0
      %p58 = por %p56, %p57
      %s60 = sadd.s32 %s59, 1
      %p63 = scmp.eq.s32.totalorder %s25, 1
      %p64 = scmp.ne.s32.totalorder %s59, %s61
      %p65 = scmp.eq.s32.totalorder %s25, 0
      %p66 = por %p64, %p65
      %p67 = scmp.ne.s32.totalorder %s59, %s61
      %p68 = scmp.eq.s32.totalorder %s30, 1
      %p69 = por %p67, %p68
      %p70 = scmp.ne.s32.totalorder %s61, %s62
      %p71 = scmp.eq.s32.totalorder %s30, 0
      %p72 = por %p70, %p71
      %p73 = scmp.ne.s32.totalorder %s61, %s62
      %p74 = scmp.eq.s32.totalorder %s31, 1
      %p75 = por %p73, %p74
      %p77 = scmp.ne.s32.totalorder %s62, %s76
      %p78 = scmp.eq.s32.totalorder %s31, 0
      %p79 = por %p77, %p78
      %s81 = sadd.s32 %s80, 1
      %p84 = scmp.eq.s32.totalorder %s25, 1
      %p85 = scmp.ne.s32.totalorder %s80, %s82
      %p86 = scmp.eq.s32.totalorder %s25, 0
      %p87 = por %p85, %p86
      %p88 = scmp.ne.s32.totalorder %s80, %s82
      %p89 = scmp.eq.s32.totalorder %s30, 1
      %p90 = por %p88, %p89
      %p91 = scmp.ne.s32.totalorder %s82, %s83
      %p92 = scmp.eq.s32.totalorder %s30, 0
      %p93 = por %p91, %p92
      %p94 = scmp.ne.s32.totalorder %s82, %s83
      %p95 = scmp.eq.s32.totalorder %s31, 1
      %p96 = por %p94, %p95
      %p98 = scmp.ne.s32.totalorder %s83, %s97
      %p99 = scmp.eq.s32.totalorder %s31, 0
      %p100 = por %p98, %p99
      %s102 = sadd.s32 %s101, 1
      %p105 = scmp.eq.s32.totalorder %s25, 1
      %p106 = scmp.ne.s32.totalorder %s101, %s103
      %p107 = scmp.eq.s32.totalorder %s25, 0
      %p108 = por %p106, %p107
      %p109 = scmp.ne.s32.totalorder %s101, %s103
      %p110 = scmp.eq.s32.totalorder %s30, 1
      %p111 = por %p109, %p110
      %p112 = scmp.ne.s32.totalorder %s103, %s104
      %p113 = scmp.eq.s32.totalorder %s30, 0
      %p114 = por %p112, %p113
      %p115 = scmp.ne.s32.totalorder %s103, %s104
      %p116 = scmp.eq.s32.totalorder %s31, 1
      %p117 = por %p115, %p116
      %p119 = scmp.ne.s32.totalorder %s104, %s118
      %p120 = scmp.eq.s32.totalorder %s31, 0
      %p121 = por %p119, %p120
      %s123 = sadd.s32 %s122, 1
      %p126 = scmp.eq.s32.totalorder %s25, 1
      %p127 = scmp.ne.s32.totalorder %s122, %s124
      %p128 = scmp.eq.s32.totalorder %s25, 0
      %p129 = por %p127, %p128
      %p130 = scmp.ne.s32.totalorder %s122, %s124
      %p131 = scmp.eq.s32.totalorder %s30, 1
      %p132 = por %p130, %p131
      %p133 = scmp.ne.s32.totalorder %s124, %s125
      %p134 = scmp.eq.s32.totalorder %s30, 0
      %p135 = por %p133, %p134
      %p136 = scmp.ne.s32.totalorder %s124, %s125
      %p137 = scmp.eq.s32.totalorder %s31, 1
      %p138 = por %p136, %p137
      %p140 = scmp.ne.s32.totalorder %s125, %s139
      %p141 = scmp.eq.s32.totalorder %s31, 0
      %p142 = por %p140, %p141
      %s144 = sadd.s32 %s143, 1
      %p147 = scmp.eq.s32.totalorder %s25, 1
      %p148 = scmp.ne.s32.totalorder %s143, %s145
      %p149 = scmp.eq.s32.totalorder %s25, 0
      %p150 = por %p148, %p149
      %p151 = scmp.ne.s32.totalorder %s143, %s145
      %p152 = scmp.eq.s32.totalorder %s30, 1
      %p153 = por %p151, %p152
      %p154 = scmp.ne.s32.totalorder %s145, %s146
      %p155 = scmp.eq.s32.totalorder %s30, 0
      %p156 = por %p154, %p155
      %p157 = scmp.ne.s32.totalorder %s145, %s146
      %p158 = scmp.eq.s32.totalorder %s31, 1
      %p159 = por %p157, %p158
      %p161 = scmp.ne.s32.totalorder %s146, %s160
      %p162 = scmp.eq.s32.totalorder %s31, 0
      %p163 = por %p161, %p162
      %s165 = sadd.s32 %s164, 1
      %p168 = scmp.eq.s32.totalorder %s25, 1
      %p169 = scmp.ne.s32.totalorder %s164, %s166
      %p170 = scmp.eq.s32.totalorder %s25, 0
      %p171 = por %p169, %p170
      %p172 = scmp.ne.s32.totalorder %s164, %s166
      %p173 = scmp.eq.s32.totalorder %s30, 1
      %p174 = por %p172, %p173
      %p175 = scmp.ne.s32.totalorder %s166, %s167
      %p176 = scmp.eq.s32.totalorder %s30, 0
      %p177 = por %p175, %p176
      %p178 = scmp.ne.s32.totalorder %s166, %s167
      %p179 = scmp.eq.s32.totalorder %s31, 1
      %p180 = por %p178, %p179
      %p182 = scmp.ne.s32.totalorder %s167, %s181
      %p183 = scmp.eq.s32.totalorder %s31, 0
      %p184 = por %p182, %p183
      %s186 = sadd.s32 %s185, 1
      %p189 = scmp.eq.s32.totalorder %s25, 1
      %p190 = scmp.ne.s32.totalorder %s185, %s187
      %p191 = scmp.eq.s32.totalorder %s25, 0
      %p192 = por %p190, %p191
      %p193 = scmp.ne.s32.totalorder %s185, %s187
      %p194 = scmp.eq.s32.totalorder %s30, 1
      %p195 = por %p193, %p194
      %p196 = scmp.ne.s32.totalorder %s187, %s188
      %p197 = scmp.eq.s32.totalorder %s30, 0
      %p198 = por %p196, %p197
      %p199 = scmp.ne.s32.totalorder %s187, %s188
      %p200 = scmp.eq.s32.totalorder %s31, 1
      %p201 = por %p199, %p200
      %p203 = scmp.ne.s32.totalorder %s188, %s202
      %p204 = scmp.eq.s32.totalorder %s31, 0
      %p205 = por %p203, %p204
      %s207 = sadd.s32 %s206, 1
      %p210 = scmp.eq.s32.totalorder %s25, 1
      %p211 = scmp.ne.s32.totalorder %s206, %s208
      %p212 = scmp.eq.s32.totalorder %s25, 0
      %p213 = por %p211, %p212
      %p214 = scmp.ne.s32.totalorder %s206, %s208
      %p215 = scmp.eq.s32.totalorder %s30, 1
      %p216 = por %p214, %p215
      %p217 = scmp.ne.s32.totalorder %s208, %s209
      %p218 = scmp.eq.s32.totalorder %s30, 0
      %p219 = por %p217, %p218
      %p220 = scmp.ne.s32.totalorder %s208, %s209
      %p221 = scmp.eq.s32.totalorder %s31, 1
      %p222 = por %p220, %p221
      %p224 = scmp.ne.s32.totalorder %s209, %s223
      %p225 = scmp.eq.s32.totalorder %s31, 0
      %p226 = por %p224, %p225
      %s228 = sadd.s32 %s227, 1
      %p231 = scmp.eq.s32.totalorder %s25, 1
      %p232 = scmp.ne.s32.totalorder %s227, %s229
      %p233 = scmp.eq.s32.totalorder %s25, 0
      %p234 = por %p232, %p233
      %p235 = scmp.ne.s32.totalorder %s227, %s229
      %p236 = scmp.eq.s32.totalorder %s30, 1
      %p237 = por %p235, %p236
      %p238 = scmp.ne.s32.totalorder %s229, %s230
      %p239 = scmp.eq.s32.totalorder %s30, 0
      %p240 = por %p238, %p239
      %p241 = scmp.ne.s32.totalorder %s229, %s230
      %p242 = scmp.eq.s32.totalorder %s31, 1
      %p243 = por %p241, %p242
      %p245 = scmp.ne.s32.totalorder %s230, %s244
      %p246 = scmp.eq.s32.totalorder %s31, 0
      %p247 = por %p245, %p246
      %s249 = sadd.s32 %s248, 1
      %p252 = scmp.eq.s32.totalorder %s25, 1
      %p253 = scmp.ne.s32.totalorder %s248, %s250
      %p254 = scmp.eq.s32.totalorder %s25, 0
      %p255 = por %p253, %p254
      %p256 = scmp.ne.s32.totalorder %s248, %s250
      %p257 = scmp.eq.s32.totalorder %s30, 1
      %p258 = por %p256, %p257
      %p259 = scmp.ne.s32.totalorder %s250, %s251
      %p260 = scmp.eq.s32.totalorder %s30, 0
      %p261 = por %p259, %p260
      %p262 = scmp.ne.s32.totalorder %s250, %s251
      %p263 = scmp.eq.s32.totalorder %s31, 1
      %p264 = por %p262, %p263
      %p266 = scmp.ne.s32.totalorder %s251, %s265
      %p267 = scmp.eq.s32.totalorder %s31, 0
      %p268 = por %p266, %p267
      %s269 = ssub.s32 %s25, %s32
      %p270 = scmp.eq.s32.totalorder %s269, 0
      %s272 = sadd.s32 %s271, 1
      %s273 = scalar_select %p270, %s271, %s272
      %p276 = pneg %p270
      %p277 = scmp.eq.s32.totalorder %s25, 1
      %p278 = por %p276, %p277
      %p279 = scmp.ne.s32.totalorder %s271, %s274
      %p280 = scmp.eq.s32.totalorder %s25, 0
      %p281 = por %p279, %p280
      %p282 = scmp.ne.s32.totalorder %s271, %s274
      %p283 = scmp.eq.s32.totalorder %s30, 1
      %p284 = por %p282, %p283
      %p285 = scmp.ne.s32.totalorder %s274, %s275
      %p286 = scmp.eq.s32.totalorder %s30, 0
      %p287 = por %p285, %p286
      %p288 = scmp.ne.s32.totalorder %s274, %s275
      %p289 = scmp.eq.s32.totalorder %s31, 1
      %p290 = por %p288, %p289
      %p292 = scmp.ne.s32.totalorder %s275, %s291
      %p293 = scmp.eq.s32.totalorder %s31, 0
      %p294 = por %p292, %p293
      %p295 = scmp.le.s32.totalorder 1, %s25
      %p296 = scmp.lt.s32.totalorder %s25, 3
      %p297 = pnand %p295, %p296
      %p298 = pneg %p297
      // Predicated region
      $region9: #{tpu_custom_call.1} parent=5 // pred_check
        _
      $region10: #{tpu_custom_call.1} parent=5 // pred_check_branch
        %300 = sbr.rel (%p297) target = $region12
      $region11: #{tpu_custom_call.1} parent=5 // pred_region
        %s301 = ssub.s32 %s25, 1
        // Predicated region
        $region13: #{tpu_custom_call.1} parent=11 // pred_check
          %p302 = pneg %p72
        $region14: #{tpu_custom_call.1} parent=11 // pred_check_branch
          %304 = sbr.rel (%p302) target = $region16
        $region15: #{tpu_custom_call.1} parent=11 // pred_region
          %306 = vsyncadd [#allocation6], 0
          %s307 = sshll.u32 %s1, 4
          %s308 = int_to_ptr.hbm [resolvable:$true] %s307
          %s309 = sshll.u32 [#allocation5], 4
          %s310 = int_to_ptr.vmem [resolvable:$true] %s309
          %315 = dma.hbm_to_vmem [thread:$0]  %s308, 128, %s310, [#allocation6], 64, 64, 4
        $region16: #{tpu_custom_call.1} parent=11 // pred_fallthru
          _
        // Predicated region
        $region17: #{tpu_custom_call.1} parent=11 // pred_check
          %p316 = pneg %p93
        $region18: #{tpu_custom_call.1} parent=11 // pred_check_branch
          %318 = sbr.rel (%p316) target = $region20
        $region19: #{tpu_custom_call.1} parent=11 // pred_region
          _
        $region20: #{tpu_custom_call.1} parent=11 // pred_fallthru
          _
        // Predicated region
        $region21: #{tpu_custom_call.1} parent=11 // pred_check
          %p319 = pneg %p114
        $region22: #{tpu_custom_call.1} parent=11 // pred_check_branch
          %321 = sbr.rel (%p319) target = $region24
        $region23: #{tpu_custom_call.1} parent=11 // pred_region
          %323 = vsyncadd [#allocation6], 0
          %s324 = sshll.u32 %s3, 4
          %s325 = int_to_ptr.hbm [resolvable:$true] %s324
          %s326 = sshll.u32 [#allocation7], 4
          %s327 = int_to_ptr.vmem [resolvable:$true] %s326
          %332 = dma.hbm_to_vmem [thread:$0]  %s325, 1024, %s327, [#allocation6], 64, 64, 4
        $region24: #{tpu_custom_call.1} parent=11 // pred_fallthru
          _
        // Predicated region
        $region25: #{tpu_custom_call.1} parent=11 // pred_check
          %p333 = pneg %p135
        $region26: #{tpu_custom_call.1} parent=11 // pred_check_branch
          %335 = sbr.rel (%p333) target = $region28
        $region27: #{tpu_custom_call.1} parent=11 // pred_region
          _
        $region28: #{tpu_custom_call.1} parent=11 // pred_fallthru
          _
        // Predicated region
        $region29: #{tpu_custom_call.1} parent=11 // pred_check
          %p336 = pneg %p156
        $region30: #{tpu_custom_call.1} parent=11 // pred_check_branch
          %338 = sbr.rel (%p336) target = $region32
        $region31: #{tpu_custom_call.1} parent=11 // pred_region
          %340 = vsyncadd [#allocation9], 0
          %s341 = sshll.u32 %s5, 4
          %s342 = int_to_ptr.hbm [resolvable:$true] %s341
          %s343 = sshll.u32 [#allocation8], 4
          %s344 = int_to_ptr.vmem [resolvable:$true] %s343
          %349 = dma.hbm_to_vmem [thread:$0]  %s342, 1024, %s344, [#allocation9], 64, 64, 4
        $region32: #{tpu_custom_call.1} parent=11 // pred_fallthru
          _
        // Predicated region
        $region33: #{tpu_custom_call.1} parent=11 // pred_check
          %p350 = pneg %p177
        $region34: #{tpu_custom_call.1} parent=11 // pred_check_branch
          %352 = sbr.rel (%p350) target = $region36
        $region35: #{tpu_custom_call.1} parent=11 // pred_region
          _
        $region36: #{tpu_custom_call.1} parent=11 // pred_fallthru
          _
        // Predicated region
        $region37: #{tpu_custom_call.1} parent=11 // pred_check
          %p353 = pneg %p198
        $region38: #{tpu_custom_call.1} parent=11 // pred_check_branch
          %355 = sbr.rel (%p353) target = $region40
        $region39: #{tpu_custom_call.1} parent=11 // pred_region
          %357 = vsyncadd [#allocation9], 0
          %s358 = sshll.u32 %s7, 4
          %s359 = int_to_ptr.hbm [resolvable:$true] %s358
          %s360 = sshll.u32 [#allocation10], 4
          %s361 = int_to_ptr.vmem [resolvable:$true] %s360
          %366 = dma.hbm_to_vmem [thread:$0]  %s359, 1024, %s361, [#allocation9], 64, 64, 4
        $region40: #{tpu_custom_call.1} parent=11 // pred_fallthru
          _
        // Predicated region
        $region41: #{tpu_custom_call.1} parent=11 // pred_check
          %p367 = pneg %p219
        $region42: #{tpu_custom_call.1} parent=11 // pred_check_branch
          %369 = sbr.rel (%p367) target = $region44
        $region43: #{tpu_custom_call.1} parent=11 // pred_region
          _
        $region44: #{tpu_custom_call.1} parent=11 // pred_fallthru
          _
        // Predicated region
        $region45: #{tpu_custom_call.1} parent=11 // pred_check
          %p370 = pneg %p240
        $region46: #{tpu_custom_call.1} parent=11 // pred_check_branch
          %372 = sbr.rel (%p370) target = $region48
        $region47: #{tpu_custom_call.1} parent=11 // pred_region
          _
        $region48: #{tpu_custom_call.1} parent=11 // pred_fallthru
          _
        // Predicated region
        $region49: #{tpu_custom_call.1} parent=11 // pred_check
          %p373 = pneg %p261
        $region50: #{tpu_custom_call.1} parent=11 // pred_check_branch
          %375 = sbr.rel (%p373) target = $region52
        $region51: #{tpu_custom_call.1} parent=11 // pred_region
          _
        $region52: #{tpu_custom_call.1} parent=11 // pred_fallthru
          _
      $region12: #{tpu_custom_call.1} parent=5 // pred_fallthru
        _
      %p376 = scmp.lt.s32.totalorder %s25, 2
      // Predicated region
      $region53: #{tpu_custom_call.1} parent=5 // pred_check
        %p377 = pneg %p376
      $region54: #{tpu_custom_call.1} parent=5 // pred_check_branch
        %379 = sbr.rel (%p377) target = $region56
      $region55: #{tpu_custom_call.1} parent=5 // pred_region
        // Predicated region
        $region57: #{tpu_custom_call.1} parent=55 // pred_check
          %p380 = pneg %p45
        $region58: #{tpu_custom_call.1} parent=55 // pred_check_branch
          %382 = sbr.rel (%p380) target = $region60
        $region59: #{tpu_custom_call.1} parent=55 // pred_region
          %s383 = sand.u32 %s35, 1
          %s384 = scalar_lea.sflag [#allocation3], %s383
          %s385 = sand.u32 %s35, 1
          %s386 = smul.addr %s385, 8
          %s387 = scalar_lea.vmem [#allocation2], %s386
          %389 = vsyncadd %s384, 0
          %s390 = smul.addr %s25, 8
          %s391 = scalar_lea.hbm %s0, %s390
          %s393 = sshll.u32 %s391, 4
          %s394 = int_to_ptr.hbm [resolvable:$true] %s393
          %s395 = sshll.u32 %s387, 4
          %s396 = int_to_ptr.vmem [resolvable:$true] %s395
          %398 = dma.hbm_to_vmem [thread:$0]  %s394, 128, %s396, %s384
        $region60: #{tpu_custom_call.1} parent=55 // pred_fallthru
          _
      $region56: #{tpu_custom_call.1} parent=5 // pred_fallthru
        _
      %p399 = scmp.le.s32.totalorder 1, %s25
      %p400 = scmp.lt.s32.totalorder %s25, 3
      %p401 = pnand %p399, %p400
      %p402 = pneg %p401
      // Predicated region
      $region61: #{tpu_custom_call.1} parent=5 // pred_check
        _
      $region62: #{tpu_custom_call.1} parent=5 // pred_check_branch
        %404 = sbr.rel (%p401) target = $region64
      $region63: #{tpu_custom_call.1} parent=5 // pred_region
        %s405 = ssub.s32 %s25, 1
        %s406 = sand.u32 %s38, 1
        %s407 = scalar_lea.sflag [#allocation3], %s406
        %s408 = sand.u32 %s38, 1
        %s409 = smul.addr %s408, 8
        %s410 = scalar_lea.vmem [#allocation2], %s409
        // Predicated region
        $region65: #{tpu_custom_call.1} parent=63 // pred_check
          %p411 = pneg %p51
        $region66: #{tpu_custom_call.1} parent=63 // pred_check_branch
          %413 = sbr.rel (%p411) target = $region68
        $region67: #{tpu_custom_call.1} parent=63 // pred_region
          %415 = dma.done %s407, 128
        $region68: #{tpu_custom_call.1} parent=63 // pred_fallthru
          _
        // Predicated region
        $region69: #{tpu_custom_call.1} parent=63 // pred_check
          %p416 = pneg %p72
        $region70: #{tpu_custom_call.1} parent=63 // pred_check_branch
          %418 = sbr.rel (%p416) target = $region72
        $region71: #{tpu_custom_call.1} parent=63 // pred_region
          %420 = dma.done [#allocation6], 128
        $region72: #{tpu_custom_call.1} parent=63 // pred_fallthru
          _
        // Predicated region
        $region73: #{tpu_custom_call.1} parent=63 // pred_check
          %p421 = pneg %p114
        $region74: #{tpu_custom_call.1} parent=63 // pred_check_branch
          %423 = sbr.rel (%p421) target = $region76
        $region75: #{tpu_custom_call.1} parent=63 // pred_region
          %425 = dma.done [#allocation6], 1024
        $region76: #{tpu_custom_call.1} parent=63 // pred_fallthru
          _
        // Predicated region
        $region77: #{tpu_custom_call.1} parent=63 // pred_check
          %p426 = pneg %p156
        $region78: #{tpu_custom_call.1} parent=63 // pred_check_branch
          %428 = sbr.rel (%p426) target = $region80
        $region79: #{tpu_custom_call.1} parent=63 // pred_region
          %430 = dma.done [#allocation9], 1024
        $region80: #{tpu_custom_call.1} parent=63 // pred_fallthru
          _
        // Predicated region
        $region81: #{tpu_custom_call.1} parent=63 // pred_check
          %p431 = pneg %p198
        $region82: #{tpu_custom_call.1} parent=63 // pred_check_branch
          %433 = sbr.rel (%p431) target = $region84
        $region83: #{tpu_custom_call.1} parent=63 // pred_region
          %435 = dma.done [#allocation9], 1024
        $region84: #{tpu_custom_call.1} parent=63 // pred_fallthru
          _
        %s436 = sand.u32 %s38, 1
        %s437 = scalar_lea.sflag [#allocation3], %s436
        %s438 = sand.u32 %s38, 1
        %s439 = smul.addr %s438, 8
        %s440 = scalar_lea.vmem [#allocation2], %s439
        %p441 = pneg %p51
        %p442 = pneg %p48
        %p443 = pneg %p72
        %p444 = pneg %p69
        %p445 = pneg %p93
        %p446 = pneg %p90
        %p447 = pneg %p114
        %p448 = pneg %p111
        %p449 = pneg %p135
        %p450 = pneg %p132
        %p451 = pneg %p156
        %p452 = pneg %p153
        %p453 = pneg %p177
        %p454 = pneg %p174
        %p455 = pneg %p198
        %p456 = pneg %p195
        %p457 = pneg %p219
        %p458 = pneg %p216
        %p459 = pneg %p240
        %p460 = pneg %p237
        %p461 = pneg %p261
        %p462 = pneg %p258
        %p463 = pneg %p287
        %p464 = pneg %p284
        %s465 = sand.u32 %s274, 1
        %s466 = scalar_lea.sflag [#allocation4], %s465
        %s467 = sand.u32 %s274, 1
        %s468 = smul.addr %s467, 8
        %s469 = scalar_lea.vmem [#allocation11], %s468
        %v471 = vld [vmem:[%s410] sm:$0xff]
        %v472 = vpack.c.bf16 %v471, %v471
        %v473 = vld [vmem:[#allocation5] sm:$0xf]
        %v474 = vld [vmem:[#allocation5 + $0x4] sm:$0xf]
        %v475 = vld [vmem:[%s2] sm:$0x1]
        %v477 = vperm.slane %v475, 0
        %v481 = vunpack.c.l.b16 %v473
        %v482 = vunpack.c.l.b16 %v474
        %v483 = vpack.c.b16 %v482, %v481
        %vm485 = vcmask 130048
        %v487 = vsel %vm485, %v472, 0
        %489 = vmatpush.bf16.msra.mxu0 0
        %490 = vmatpush.bf16.msra.mxu0 0
        %491 = vmatpush.bf16.msra.mxu0 0
        %492 = vmatpush.bf16.msra.mxu0 0
        %493 = vmatpush.bf16.msra.mxu0 0
        %494 = vmatpush.bf16.msra.mxu0 0
        %495 = vmatpush.bf16.msra.mxu0 0
        %496 = vmatpush.bf16.msra.mxu0 %v483
        %497 = vmatmul.bf16.gmra.mxu0 %v487
        %v498 = vpop.f32.mrf.mxu0
        %v499 = vadd.f32 %v477, %v498
        %v500 = vpop.f32.mrf.mxu0
        %501 = vdwg.mxu0
        %v502 = vmax.f32 %v499, 0.0
        %v503 = vpack.c.bf16 %v502, %v502
        %v504 = vld [vmem:[#allocation7] sm:$0xf]
        %v505 = vld [vmem:[#allocation7 + $0x4] sm:$0xf]
        %v506 = vld [vmem:[#allocation7 + $0x8] sm:$0xf]
        %v507 = vld [vmem:[#allocation7 + $0xc] sm:$0xf]
        %v508 = vld [vmem:[#allocation7 + $0x10] sm:$0xf]
        %v509 = vld [vmem:[#allocation7 + $0x14] sm:$0xf]
        %v510 = vld [vmem:[#allocation7 + $0x18] sm:$0xf]
        %v511 = vld [vmem:[#allocation7 + $0x1c] sm:$0xf]
        %v512 = vld [vmem:[#allocation7 + $0x20] sm:$0xf]
        %v513 = vld [vmem:[#allocation7 + $0x24] sm:$0xf]
        %v514 = vld [vmem:[#allocation7 + $0x28] sm:$0xf]
        %v515 = vld [vmem:[#allocation7 + $0x2c] sm:$0xf]
        %v516 = vld [vmem:[#allocation7 + $0x30] sm:$0xf]
        %v517 = vld [vmem:[#allocation7 + $0x34] sm:$0xf]
        %v518 = vld [vmem:[#allocation7 + $0x38] sm:$0xf]
        %v519 = vld [vmem:[#allocation7 + $0x3c] sm:$0xf]
        %v520 = vld [vmem:[%s4] sm:$0x1]
        %v522 = vperm.slane %v520, 0
        %v540 = vunpack.c.l.b16 %v504
        %v541 = vunpack.c.l.b16 %v505
        %v542 = vunpack.c.l.b16 %v506
        %v543 = vunpack.c.l.b16 %v507
        %v544 = vunpack.c.l.b16 %v508
        %v545 = vunpack.c.l.b16 %v509
        %v546 = vunpack.c.l.b16 %v510
        %v547 = vunpack.c.l.b16 %v511
        %v548 = vunpack.c.l.b16 %v512
        %v549 = vunpack.c.l.b16 %v513
        %v550 = vunpack.c.l.b16 %v514
        %v551 = vunpack.c.l.b16 %v515
        %v552 = vunpack.c.l.b16 %v516
        %v553 = vunpack.c.l.b16 %v517
        %v554 = vunpack.c.l.b16 %v518
        %v555 = vunpack.c.l.b16 %v519
        %v556 = vpack.c.b16 %v541, %v540
        %v557 = vpack.c.b16 %v543, %v542
        %v558 = vpack.c.b16 %v545, %v544
        %v559 = vpack.c.b16 %v547, %v546
        %v560 = vpack.c.b16 %v549, %v548
        %v561 = vpack.c.b16 %v551, %v550
        %v562 = vpack.c.b16 %v553, %v552
        %v563 = vpack.c.b16 %v555, %v554
        %572 = vmatpush.bf16.msra.mxu0 %v563
        %573 = vmatpush.bf16.msra.mxu0 %v562
        %574 = vmatpush.bf16.msra.mxu0 %v561
        %575 = vmatpush.bf16.msra.mxu0 %v560
        %576 = vmatpush.bf16.msra.mxu0 %v559
        %577 = vmatpush.bf16.msra.mxu0 %v558
        %578 = vmatpush.bf16.msra.mxu0 %v557
        %579 = vmatpush.bf16.msra.mxu0 %v556
        %580 = vmatmul.bf16.gmra.mxu0 %v503
        %v581 = vpop.f32.mrf.mxu0
        %v582 = vadd.f32 %v522, %v581
        %v583 = vpop.f32.mrf.mxu0
        %584 = vdwg.mxu0
        %v585 = vmax.f32 %v582, 0.0
        %v586 = vpack.c.bf16 %v585, %v585
        %v587 = vld [vmem:[#allocation8] sm:$0xf]
        %v588 = vld [vmem:[#allocation8 + $0x4] sm:$0xf]
        %v589 = vld [vmem:[#allocation8 + $0x8] sm:$0xf]
        %v590 = vld [vmem:[#allocation8 + $0xc] sm:$0xf]
        %v591 = vld [vmem:[#allocation8 + $0x10] sm:$0xf]
        %v592 = vld [vmem:[#allocation8 + $0x14] sm:$0xf]
        %v593 = vld [vmem:[#allocation8 + $0x18] sm:$0xf]
        %v594 = vld [vmem:[#allocation8 + $0x1c] sm:$0xf]
        %v595 = vld [vmem:[#allocation8 + $0x20] sm:$0xf]
        %v596 = vld [vmem:[#allocation8 + $0x24] sm:$0xf]
        %v597 = vld [vmem:[#allocation8 + $0x28] sm:$0xf]
        %v598 = vld [vmem:[#allocation8 + $0x2c] sm:$0xf]
        %v599 = vld [vmem:[#allocation8 + $0x30] sm:$0xf]
        %v600 = vld [vmem:[#allocation8 + $0x34] sm:$0xf]
        %v601 = vld [vmem:[#allocation8 + $0x38] sm:$0xf]
        %v602 = vld [vmem:[#allocation8 + $0x3c] sm:$0xf]
        %v603 = vld [vmem:[%s6] sm:$0x1]
        %v605 = vperm.slane %v603, 0
        %v623 = vunpack.c.l.b16 %v587
        %v624 = vunpack.c.l.b16 %v588
        %v625 = vunpack.c.l.b16 %v589
        %v626 = vunpack.c.l.b16 %v590
        %v627 = vunpack.c.l.b16 %v591
        %v628 = vunpack.c.l.b16 %v592
        %v629 = vunpack.c.l.b16 %v593
        %v630 = vunpack.c.l.b16 %v594
        %v631 = vunpack.c.l.b16 %v595
        %v632 = vunpack.c.l.b16 %v596
        %v633 = vunpack.c.l.b16 %v597
        %v634 = vunpack.c.l.b16 %v598
        %v635 = vunpack.c.l.b16 %v599
        %v636 = vunpack.c.l.b16 %v600
        %v637 = vunpack.c.l.b16 %v601
        %v638 = vunpack.c.l.b16 %v602
        %v639 = vpack.c.b16 %v624, %v623
        %v640 = vpack.c.b16 %v626, %v625
        %v641 = vpack.c.b16 %v628, %v627
        %v642 = vpack.c.b16 %v630, %v629
        %v643 = vpack.c.b16 %v632, %v631
        %v644 = vpack.c.b16 %v634, %v633
        %v645 = vpack.c.b16 %v636, %v635
        %v646 = vpack.c.b16 %v638, %v637
        %655 = vmatpush.bf16.msra.mxu0 %v646
        %656 = vmatpush.bf16.msra.mxu0 %v645
        %657 = vmatpush.bf16.msra.mxu0 %v644
        %658 = vmatpush.bf16.msra.mxu0 %v643
        %659 = vmatpush.bf16.msra.mxu0 %v642
        %660 = vmatpush.bf16.msra.mxu0 %v641
        %661 = vmatpush.bf16.msra.mxu0 %v640
        %662 = vmatpush.bf16.msra.mxu0 %v639
        %663 = vmatmul.bf16.gmra.mxu0 %v586
        %v664 = vpop.f32.mrf.mxu0
        %v665 = vadd.f32 %v605, %v664
        %v666 = vpop.f32.mrf.mxu0
        %667 = vdwg.mxu0
        %v668 = vmax.f32 %v665, 0.0
        %v669 = vpack.c.bf16 %v668, %v668
        %v670 = vld [vmem:[#allocation10] sm:$0xf]
        %v671 = vld [vmem:[#allocation10 + $0x4] sm:$0xf]
        %v672 = vld [vmem:[#allocation10 + $0x8] sm:$0xf]
        %v673 = vld [vmem:[#allocation10 + $0xc] sm:$0xf]
        %v674 = vld [vmem:[#allocation10 + $0x10] sm:$0xf]
        %v675 = vld [vmem:[#allocation10 + $0x14] sm:$0xf]
        %v676 = vld [vmem:[#allocation10 + $0x18] sm:$0xf]
        %v677 = vld [vmem:[#allocation10 + $0x1c] sm:$0xf]
        %v678 = vld [vmem:[#allocation10 + $0x20] sm:$0xf]
        %v679 = vld [vmem:[#allocation10 + $0x24] sm:$0xf]
        %v680 = vld [vmem:[#allocation10 + $0x28] sm:$0xf]
        %v681 = vld [vmem:[#allocation10 + $0x2c] sm:$0xf]
        %v682 = vld [vmem:[#allocation10 + $0x30] sm:$0xf]
        %v683 = vld [vmem:[#allocation10 + $0x34] sm:$0xf]
        %v684 = vld [vmem:[#allocation10 + $0x38] sm:$0xf]
        %v685 = vld [vmem:[#allocation10 + $0x3c] sm:$0xf]
        %v686 = vld [vmem:[%s8] sm:$0x1]
        %v688 = vperm.slane %v686, 0
        %v706 = vunpack.c.l.b16 %v670
        %v707 = vunpack.c.l.b16 %v671
        %v708 = vunpack.c.l.b16 %v672
        %v709 = vunpack.c.l.b16 %v673
        %v710 = vunpack.c.l.b16 %v674
        %v711 = vunpack.c.l.b16 %v675
        %v712 = vunpack.c.l.b16 %v676
        %v713 = vunpack.c.l.b16 %v677
        %v714 = vunpack.c.l.b16 %v678
        %v715 = vunpack.c.l.b16 %v679
        %v716 = vunpack.c.l.b16 %v680
        %v717 = vunpack.c.l.b16 %v681
        %v718 = vunpack.c.l.b16 %v682
        %v719 = vunpack.c.l.b16 %v683
        %v720 = vunpack.c.l.b16 %v684
        %v721 = vunpack.c.l.b16 %v685
        %v722 = vpack.c.b16 %v707, %v706
        %v723 = vpack.c.b16 %v709, %v708
        %v724 = vpack.c.b16 %v711, %v710
        %v725 = vpack.c.b16 %v713, %v712
        %v726 = vpack.c.b16 %v715, %v714
        %v727 = vpack.c.b16 %v717, %v716
        %v728 = vpack.c.b16 %v719, %v718
        %v729 = vpack.c.b16 %v721, %v720
        %738 = vmatpush.bf16.msra.mxu0 %v729
        %739 = vmatpush.bf16.msra.mxu0 %v728
        %740 = vmatpush.bf16.msra.mxu0 %v727
        %741 = vmatpush.bf16.msra.mxu0 %v726
        %742 = vmatpush.bf16.msra.mxu0 %v725
        %743 = vmatpush.bf16.msra.mxu0 %v724
        %744 = vmatpush.bf16.msra.mxu0 %v723
        %745 = vmatpush.bf16.msra.mxu0 %v722
        %746 = vmatmul.bf16.gmra.mxu0 %v669
        %v747 = vpop.f32.mrf.mxu0
        %v748 = vadd.f32 %v688, %v747
        %v749 = vpop.f32.mrf.mxu0
        %750 = vdwg.mxu0
        %751 = vadd.xlane.f32.xlu0 %v748
        %v752 = vpop.xlane.xlu0 %751
        %v753 = vmul.f32 %v752, 0.0625
        %v754 = vmul.f32 %v748, %v748
        %755 = vadd.xlane.f32.xlu0 %v754
        %v756 = vpop.xlane.xlu0 %755
        %v757 = vmul.f32 %v756, 0.0625
        %v758 = vmul.f32 %v753, %v753
        %v759 = vsub.f32 %v757, %v758
        %v760 = vmax.f32 %v759, 0.0
        %v761 = vsub.f32 %v748, %v753
        %v762 = vadd.f32 %v760, 1e-05
        %v763 = vrsqrt.pop %v762
        %v764 = vmul.f32 %v763, %v762
        %v765 = vmul.f32 %v764, %v763
        %v766 = vmul.f32 0.5, %v765
        %v767 = vsub.f32 1.5, %v766
        %v768 = vmul.f32 %v763, %v767
        %vm769 = vweird.f32 %v762
        %vm770 = vweird.f32 %v763
        %vm771 = vmor %vm769, %vm770
        %v772 = vsel %vm771, %v763, %v768
        %v773 = vmul.f32 %v761, %v772
        %v774 = vld [vmem:[%s9] sm:$0x1]
        %v776 = vperm.slane %v774, 0
        %v778 = vmul.f32 %v773, %v776
        %v779 = vld [vmem:[%s10] sm:$0x1]
        %v781 = vperm.slane %v779, 0
        %v783 = vadd.f32 %v778, %v781
        %784 = vst [vmem:[%s469] sm:$0xff] %v783
        %s785 = sand.u32 %s274, 1
        %s786 = scalar_lea.sflag [#allocation4], %s785
        %s787 = sand.u32 %s274, 1
        %s788 = smul.addr %s787, 8
        %s789 = scalar_lea.vmem [#allocation11], %s788
        // Predicated region
        $region85: #{tpu_custom_call.1} parent=63 // pred_check
          %p790 = pneg %p284
        $region86: #{tpu_custom_call.1} parent=63 // pred_check_branch
          %792 = sbr.rel (%p790) target = $region88
        $region87: #{tpu_custom_call.1} parent=63 // pred_region
          %794 = vsyncadd %s786, 0
          %s795 = smul.addr %s30, 8
          %s796 = scalar_lea.hbm %s11, %s795
          %s798 = sshll.u32 %s789, 4
          %s799 = int_to_ptr.vmem [resolvable:$true] %s798
          %s800 = sshll.u32 %s796, 4
          %s801 = int_to_ptr.hbm [resolvable:$true] %s800
          %803 = dma.vmem_to_hbm [thread:$0]  %s799, 128, %s801, %s786
        $region88: #{tpu_custom_call.1} parent=63 // pred_fallthru
          _
      $region64: #{tpu_custom_call.1} parent=5 // pred_fallthru
        _
      %p804 = scmp.le.s32.totalorder 2, %s25
      // Predicated region
      $region89: #{tpu_custom_call.1} parent=5 // pred_check
        %p805 = pneg %p804
      $region90: #{tpu_custom_call.1} parent=5 // pred_check_branch
        %807 = sbr.rel (%p805) target = $region92
      $region91: #{tpu_custom_call.1} parent=5 // pred_region
        %s808 = ssub.s32 %s25, 2
        // Predicated region
        $region93: #{tpu_custom_call.1} parent=91 // pred_check
          %p809 = pneg %p290
        $region94: #{tpu_custom_call.1} parent=91 // pred_check_branch
          %811 = sbr.rel (%p809) target = $region96
        $region95: #{tpu_custom_call.1} parent=91 // pred_region
          %s812 = sand.u32 %s275, 1
          %s813 = scalar_lea.sflag [#allocation4], %s812
          %s814 = sand.u32 %s275, 1
          %s815 = smul.addr %s814, 8
          %s816 = scalar_lea.vmem [#allocation11], %s815
          %818 = dma.done %s813, 128
        $region96: #{tpu_custom_call.1} parent=91 // pred_fallthru
          _
      $region92: #{tpu_custom_call.1} parent=5 // pred_fallthru
        _
    $region6: #{tpu_custom_call.1} parent=1 // loop_footer
      %s29 = sadd.s32 1, %s25
    $region7: #{tpu_custom_call.1} parent=1 // loop_footer_branch
      %24 = sbr.rel target = $region3
    $region8: #{tpu_custom_call.1} parent=1 // loop_exit
      _
    %819 = vsyncpa [#allocation3], 1
    %s820 = scalar_lea.sflag [#allocation3], 1
    %821 = vsyncpa %s820, 1
    %822 = vsyncpa [#allocation6], 1
    %823 = vsyncpa [#allocation9], 1
    %824 = vsyncpa [#allocation4], 1
    %s825 = scalar_lea.sflag [#allocation4], 1
    %826 = vsyncpa %s825, 1

</llo_original>
